<compile_context>
chip_gen: v6e
topology: v6e:2x2x1
jax: 0.10.0
libtpu: 0.0.40
codegen_flags: <defaults>
</compile_context>

<pallas_src>
import functools

import jax
import jax.numpy as jnp
from jax import lax
from jax.experimental import pallas as pl
from jax.experimental.pallas import tpu as pltpu
import numpy as np

EPS = 1e-5


def _round_up(x, m):
    return (x + m - 1) // m * m


def _vmem_bytes_estimate(B, HW, C_pad, P_pad):
    L = B * HW
    blocks = 2 * 2 * (C_pad * L * 4)                      # in + out blocks, double-buffered
    slab = (9 * P_pad * L * 2) if P_pad < 128 else 0      # bf16 slab scratch
    acts = 2 * max(C_pad, P_pad) * L * 4                  # live f32 intermediates
    masks = 9 * L * 4
    weights = (P_pad * C_pad + 9 * P_pad * P_pad + C_pad * P_pad) * 2
    cols = 8 * max(C_pad, P_pad) * 128 * 4                # (C,1) scale/shift columns (lane-padded)
    return blocks + slab + acts + masks + weights + cols


def _pick_images_per_step(N, HW, C_pad, P_pad, max_lanes=4096, budget=40 << 20):
    """Largest power-of-two divisor of N whose per-step footprint stays modest."""
    B = 1
    while (N % (2 * B) == 0 and (2 * B) * HW <= max_lanes
           and _vmem_bytes_estimate(2 * B, HW, C_pad, P_pad) <= budget):
        B *= 2
    return B


def _make_border_masks(H, W, B):
    """(9, B*H*W) f32 {0,1} validity masks for the 9 taps of a SAME 3x3 conv.

    Computed per-image and tiled B times, so when the lane axis holds B images the same
    masks also zero out values that a whole-band roll would leak across image boundaries.
    """
    HW = H * W
    q = np.arange(HW)
    h = q // W
    w = q % W
    masks = np.zeros((9, HW), np.float32)
    t = 0
    for dh in (-1, 0, 1):
        for dw in (-1, 0, 1):
            valid = ((h + dh >= 0) & (h + dh <= H - 1) &
                     (w + dw >= 0) & (w + dw <= W - 1))
            masks[t] = valid.astype(np.float32)
            t += 1
    return jnp.asarray(np.tile(masks, (1, B)), dtype=jnp.float32)


def _bottleneck_kernel(H, W, B, use_slab,
                       x_ref, mask_ref,
                       s1_ref, t1_ref, w1_ref,
                       s2_ref, t2_ref, w2_ref,
                       s3_ref, t3_ref, w3_ref, b3_ref,
                       out_ref, *scratch):
    L = B * H * W
    P = w2_ref.shape[0]

    # BN1 + ReLU (per-channel scale/shift broadcast over the lane axis)
    y = jnp.maximum(x_ref[...] * s1_ref[...] + t1_ref[...], 0.0)

    # conv1 (1x1): bf16 operands, f32 accumulation (conv1 bias folded into t2 on host)
    y = jnp.dot(w1_ref[...], y.astype(jnp.bfloat16),
                preferred_element_type=jnp.float32)                      # (P, L)

    # BN2 + ReLU
    y = jnp.maximum(y * s2_ref[...] + t2_ref[...], 0.0)

    # conv2 (3x3, stride 1, SAME): 9 lane-rolled copies, each multiplied by its precomputed
    # border mask (kills both zero-padding taps and cross-image roll wraparound).
    taps = [(dh, dw) for dh in (-1, 0, 1) for dw in (-1, 0, 1)]
    if use_slab:
        slab_ref = scratch[0]
        for t, (dh, dw) in enumerate(taps):
            s = dh * W + dw
            shifted = y if s == 0 else pltpu.roll(y, (L - s) % L, 1)
            if s != 0:
                shifted = shifted * mask_ref[t:t + 1, :]
            slab_ref[t * P:(t + 1) * P, :] = shifted.astype(jnp.bfloat16)
        y2 = jnp.dot(w2_ref[...], slab_ref[...],
                     preferred_element_type=jnp.float32)                 # (P, L)
    else:
        # P_pad >= 128: per-tap matmuls with K=P already fill the MXU contraction depth;
        # skip the slab round-trip entirely (lighter on VMEM / store slot).
        y2 = None
        for t, (dh, dw) in enumerate(taps):
            s = dh * W + dw
            shifted = y if s == 0 else pltpu.roll(y, (L - s) % L, 1)
            if s != 0:
                shifted = shifted * mask_ref[t:t + 1, :]
            part = jnp.dot(w2_ref[:, t * P:(t + 1) * P], shifted.astype(jnp.bfloat16),
                           preferred_element_type=jnp.float32)
            y2 = part if y2 is None else y2 + part

    # BN3 + ReLU (conv2 bias folded into t3 on host)
    y2 = jnp.maximum(y2 * s3_ref[...] + t3_ref[...], 0.0)

    # conv3 (1x1, planes -> 2*planes) + bias, then residual add.
    # Residual is re-read from the (still VMEM-resident) input block here instead of keeping
    # it live from the top of the kernel -> shorter live range, less vreg pressure.
    y3 = jnp.dot(w3_ref[...], y2.astype(jnp.bfloat16),
                 preferred_element_type=jnp.float32) + b3_ref[...]
    out_ref[...] = (y3 + x_ref[...]).astype(out_ref.dtype)


def bottleneck_forward(x_nchw, params):
    (s1, t1, w1, b1, s2, t2, w2, b2, s3, t3, w3, b3) = params
    N, Cin, H, W = x_nchw.shape
    P = w1.shape[1]
    Cout = w3.shape[1]
    # residual add requires stride=1, no downsample, inplanes == planes * expansion
    assert Cin == Cout, "Bottleneck residual add needs inplanes == 2*planes (stride=1, no downsample)"
    HW = H * W

    # Channel padding: f32 sublane (8) for Cin/Cout, packed-bf16 sublane (16) for planes
    # so the bf16 slab tap-row stores are full-packed-tile aligned.
    C_pad = _round_up(Cin, 8)
    P_pad = _round_up(P, 16)

    # Images per grid step (amortize per-step overhead, widen lane/MXU-N dim).
    if HW % 128 != 0:
        B = N                       # single full-array block -> no lane divisibility constraint
    else:
        B = _pick_images_per_step(N, HW, C_pad, P_pad)
    L = B * HW
    use_slab = P_pad < 128          # stacked K=9*P slab fills MXU contraction depth for small P

    # ---------------- host-side prep ----------------
    # NCHW -> channel-major (C_pad, N*HW): lane axis = flat (image, h, w).
    x_flat = x_nchw.reshape(N, Cin, HW)
    if C_pad != Cin:
        x_flat = jnp.pad(x_flat, ((0, 0), (0, C_pad - Cin), (0, 0)))
    x_cl = jnp.transpose(x_flat, (1, 0, 2)).reshape(C_pad, N * HW)

    def padw(a, rows, cols):
        return jnp.pad(a, ((0, rows - a.shape[0]), (0, cols - a.shape[1])))

    w1t = padw(jnp.transpose(w1), P_pad, C_pad).astype(jnp.bfloat16)        # (P_pad, C_pad)
    w2p = jnp.pad(w2, ((0, 0), (0, P_pad - P), (0, P_pad - P)))             # (9, P_pad, P_pad)
    w2t = jnp.transpose(w2p, (2, 0, 1)).reshape(P_pad, 9 * P_pad).astype(jnp.bfloat16)
    w3t = padw(jnp.transpose(w3), C_pad, P_pad).astype(jnp.bfloat16)        # (C_pad, P_pad)

    def padc(v, n):
        v = v.reshape(-1)
        return jnp.pad(v, (0, n - v.shape[0])).reshape(n, 1).astype(jnp.float32)

    s1c, t1c = padc(s1, C_pad), padc(t1, C_pad)
    s2c = padc(s2, P_pad)
    t2c = padc(s2 * b1 + t2, P_pad)          # fold conv1 bias into BN2 shift
    s3c = padc(s3, P_pad)
    t3c = padc(s3 * b2 + t3, P_pad)          # fold conv2 bias into BN3 shift
    b3c = padc(b3, C_pad)

    masks = _make_border_masks(H, W, B)      # (9, L) f32 {0,1}, hoisted off the VPU hot loop

    def full_spec(a):
        nd = a.ndim
        return pl.BlockSpec(a.shape, lambda n, _nd=nd: (0,) * _nd)

    est = _vmem_bytes_estimate(B, HW, C_pad, P_pad)
    vmem_limit = int(min(max(1.5 * est + (4 << 20), 16 << 20), 48 << 20))

    scratch = [pltpu.VMEM((9 * P_pad, L), jnp.bfloat16)] if use_slab else []

    grid_spec = pltpu.PrefetchScalarGridSpec(
        num_scalar_prefetch=0,
        grid=(N // B,),
        in_specs=[pl.BlockSpec((C_pad, L), lambda n: (0, n)),
                  full_spec(masks),
                  full_spec(s1c), full_spec(t1c), full_spec(w1t),
                  full_spec(s2c), full_spec(t2c), full_spec(w2t),
                  full_spec(s3c), full_spec(t3c), full_spec(w3t), full_spec(b3c)],
        out_specs=pl.BlockSpec((C_pad, L), lambda n: (0, n)),
        scratch_shapes=scratch,
    )

    out_cl = pl.pallas_call(
        functools.partial(_bottleneck_kernel, H, W, B, use_slab),
        out_shape=jax.ShapeDtypeStruct((C_pad, N * HW), jnp.float32),
        grid_spec=grid_spec,
        compiler_params=pltpu.CompilerParams(
            dimension_semantics=("parallel",),
            vmem_limit_bytes=vmem_limit),
    )(x_cl, masks, s1c, t1c, w1t, s2c, t2c, w2t, s3c, t3c, w3t, b3c)

    out = out_cl.reshape(C_pad, N, HW).transpose(1, 0, 2)[:, :Cout].reshape(N, Cout, H, W)
    return out


def make_params(key, inplanes, planes):
    ks = jax.random.split(key, 20)

    def rnd(i, shape, scale=0.1):
        return (scale * jax.random.normal(ks[i], shape)).astype(jnp.float32)

    def bn(i, c):
        gamma = 1.0 + 0.1 * jax.random.normal(ks[i], (c,))
        beta = 0.05 * jax.random.normal(ks[i + 1], (c,))
        mean = 0.1 * jax.random.normal(ks[i + 2], (c,))
        var = jax.random.uniform(ks[i + 3], (c,), minval=0.5, maxval=1.5)
        scale = gamma / jnp.sqrt(var + EPS)
        shift = beta - mean * scale
        return (scale.reshape(1, c).astype(jnp.float32),
                shift.reshape(1, c).astype(jnp.float32))

    s1, t1 = bn(0, inplanes)
    s2, t2 = bn(4, planes)
    s3, t3 = bn(8, planes)
    w1 = rnd(12, (inplanes, planes))             # conv1 1x1, (in, out)
    b1 = rnd(13, (1, planes))
    w2 = rnd(14, (9, planes, planes))            # conv2 3x3, (tap, in, out), tap = kh*3+kw
    b2 = rnd(15, (1, planes))
    w3 = rnd(16, (planes, 2 * planes))           # conv3 1x1, (in, out)
    b3 = rnd(17, (1, 2 * planes))
    return (s1, t1, w1, b1, s2, t2, w2, b2, s3, t3, w3, b3)


def reference_forward(x_nchw, params):
    """Pure-JAX f32 reference (same math, NHWC, lax conv)."""
    (s1, t1, w1, b1, s2, t2, w2, b2, s3, t3, w3, b3) = params
    x = jnp.transpose(x_nchw, (0, 2, 3, 1))
    y = jnp.maximum(x * s1 + t1, 0.0)
    y = jnp.einsum('nhwc,co->nhwo', y, w1) + b1[0]
    y = jnp.maximum(y * s2 + t2, 0.0)
    w2_hwio = w2.reshape(3, 3, w2.shape[1], w2.shape[2])
    y = lax.conv_general_dilated(y, w2_hwio, (1, 1), 'SAME',
                                 dimension_numbers=('NHWC', 'HWIO', 'NHWC')) + b2[0]
    y = jnp.maximum(y * s3 + t3, 0.0)
    y = jnp.einsum('nhwc,co->nhwo', y, w3) + b3[0]
    y = y + x
    return jnp.transpose(y, (0, 3, 1, 2))


if __name__ == "__main__":
    inplanes, planes = 4, 2            # expansion = 2 -> out channels == inplanes (residual add ok)
    N, H, W = 2, 16, 16
    key = jax.random.PRNGKey(0)
    kx, kp = jax.random.split(key)
    x = jax.random.normal(kx, (N, inplanes, H, W), dtype=jnp.float32)
    params = make_params(kp, inplanes, planes)

    out = jax.block_until_ready(bottleneck_forward(x, params))

    ref = reference_forward(x, params)
    # bf16 matmul operands (f32 accumulation) -> loosen tolerance accordingly
    np.testing.assert_allclose(np.asarray(out), np.asarray(ref), atol=3e-2, rtol=3e-2)
    print("KERNEL_OK")
</pallas_src>

<mosaic_0001>
module attributes {stable_mosaic.version = 11 : i64} {
  func.func @_bottleneck_kernel(%arg0: i32, %arg1: memref<8x512xf32, #tpu.memory_space<vmem>>, %arg2: memref<9x512xf32, #tpu.memory_space<vmem>>, %arg3: memref<8x1xf32, #tpu.memory_space<vmem>>, %arg4: memref<8x1xf32, #tpu.memory_space<vmem>>, %arg5: memref<16x8xbf16, #tpu.memory_space<vmem>>, %arg6: memref<16x1xf32, #tpu.memory_space<vmem>>, %arg7: memref<16x1xf32, #tpu.memory_space<vmem>>, %arg8: memref<16x144xbf16, #tpu.memory_space<vmem>>, %arg9: memref<16x1xf32, #tpu.memory_space<vmem>>, %arg10: memref<16x1xf32, #tpu.memory_space<vmem>>, %arg11: memref<8x16xbf16, #tpu.memory_space<vmem>>, %arg12: memref<8x1xf32, #tpu.memory_space<vmem>>, %arg13: memref<8x512xf32, #tpu.memory_space<vmem>>, %arg14: memref<144x512xbf16, #tpu.memory_space<vmem>>) attributes {dimension_semantics = [#tpu.dimension_semantics<parallel>], iteration_bounds = array<i64: 1>, scalar_prefetch = 0 : i64, scratch_operands = 1 : i64, tpu.core_type = #tpu.core_type<tc>, window_params = [{transform_indices = @transform_0, window_bounds = array<i64: 8, 512>}, {pipeline_mode = #tpu.pipeline_mode<synchronous>, transform_indices = @transform_1, window_bounds = array<i64: 9, 512>}, {pipeline_mode = #tpu.pipeline_mode<synchronous>, transform_indices = @transform_2, window_bounds = array<i64: 8, 1>}, {pipeline_mode = #tpu.pipeline_mode<synchronous>, transform_indices = @transform_3, window_bounds = array<i64: 8, 1>}, {pipeline_mode = #tpu.pipeline_mode<synchronous>, transform_indices = @transform_4, window_bounds = array<i64: 16, 8>}, {pipeline_mode = #tpu.pipeline_mode<synchronous>, transform_indices = @transform_5, window_bounds = array<i64: 16, 1>}, {pipeline_mode = #tpu.pipeline_mode<synchronous>, transform_indices = @transform_6, window_bounds = array<i64: 16, 1>}, {pipeline_mode = #tpu.pipeline_mode<synchronous>, transform_indices = @transform_7, window_bounds = array<i64: 16, 144>}, {pipeline_mode = #tpu.pipeline_mode<synchronous>, transform_indices = @transform_8, window_bounds = array<i64: 16, 1>}, {pipeline_mode = #tpu.pipeline_mode<synchronous>, transform_indices = @transform_9, window_bounds = array<i64: 16, 1>}, {pipeline_mode = #tpu.pipeline_mode<synchronous>, transform_indices = @transform_10, window_bounds = array<i64: 8, 16>}, {pipeline_mode = #tpu.pipeline_mode<synchronous>, transform_indices = @transform_11, window_bounds = array<i64: 8, 1>}, {transform_indices = @transform_12, window_bounds = array<i64: 8, 512>}]} {
    %c0 = arith.constant 0 : index
    %c0_0 = arith.constant 0 : index
    %0 = vector.load %arg1[%c0, %c0_0] : memref<8x512xf32, #tpu.memory_space<vmem>>, vector<8x512xf32>
    %c0_1 = arith.constant 0 : index
    %c0_2 = arith.constant 0 : index
    %1 = vector.load %arg3[%c0_1, %c0_2] : memref<8x1xf32, #tpu.memory_space<vmem>>, vector<8x1xf32>
    %2 = vector.broadcast %1 : vector<8x1xf32> to vector<8x512xf32>
    %3 = arith.mulf %0, %2 : vector<8x512xf32>
    %c0_3 = arith.constant 0 : index
    %c0_4 = arith.constant 0 : index
    %4 = vector.load %arg4[%c0_3, %c0_4] : memref<8x1xf32, #tpu.memory_space<vmem>>, vector<8x1xf32>
    %5 = vector.broadcast %4 : vector<8x1xf32> to vector<8x512xf32>
    %6 = arith.addf %3, %5 : vector<8x512xf32>
    %cst = arith.constant 0.000000e+00 : f32
    %7 = vector.broadcast %cst : f32 to vector<8x512xf32>
    %8 = arith.maximumf %6, %7 : vector<8x512xf32>
    %c0_5 = arith.constant 0 : index
    %c0_6 = arith.constant 0 : index
    %9 = vector.load %arg5[%c0_5, %c0_6] : memref<16x8xbf16, #tpu.memory_space<vmem>>, vector<16x8xbf16>
    %10 = arith.truncf %8 : vector<8x512xf32> to vector<8x512xbf16>
    %cst_7 = arith.constant dense<0.000000e+00> : vector<16x512xf32>
    %11 = tpu.matmul %9, %10, %cst_7 {dimension_numbers = #tpu.dot_dimension_numbers<[1], [0], [0], [1], [0, 0, 1, 1], [], []>} : vector<16x8xbf16>, vector<8x512xbf16>, vector<16x512xf32> -> vector<16x512xf32>
    %c0_8 = arith.constant 0 : index
    %c0_9 = arith.constant 0 : index
    %12 = vector.load %arg6[%c0_8, %c0_9] : memref<16x1xf32, #tpu.memory_space<vmem>>, vector<16x1xf32>
    %13 = vector.broadcast %12 : vector<16x1xf32> to vector<16x512xf32>
    %14 = arith.mulf %11, %13 : vector<16x512xf32>
    %c0_10 = arith.constant 0 : index
    %c0_11 = arith.constant 0 : index
    %15 = vector.load %arg7[%c0_10, %c0_11] : memref<16x1xf32, #tpu.memory_space<vmem>>, vector<16x1xf32>
    %16 = vector.broadcast %15 : vector<16x1xf32> to vector<16x512xf32>
    %17 = arith.addf %14, %16 : vector<16x512xf32>
    %cst_12 = arith.constant 0.000000e+00 : f32
    %18 = vector.broadcast %cst_12 : f32 to vector<16x512xf32>
    %19 = arith.maximumf %17, %18 : vector<16x512xf32>
    %c17_i32 = arith.constant 17 : i32
    %20 = tpu.dynamic_rotate %19 by %c17_i32 dim 1 : vector<16x512xf32>, i32 -> vector<16x512xf32>
    %c0_13 = arith.constant 0 : index
    %c0_14 = arith.constant 0 : index
    %21 = vector.load %arg2[%c0_13, %c0_14] : memref<9x512xf32, #tpu.memory_space<vmem>>, vector<1x512xf32>
    %22 = vector.broadcast %21 : vector<1x512xf32> to vector<16x512xf32>
    %23 = arith.mulf %20, %22 : vector<16x512xf32>
    %24 = arith.truncf %23 : vector<16x512xf32> to vector<16x512xbf16>
    %c0_15 = arith.constant 0 : index
    %c0_16 = arith.constant 0 : index
    %25 = vector.load %arg14[%c0_15, %c0_16] : memref<144x512xbf16, #tpu.memory_space<vmem>>, vector<16x512xbf16>
    tpu.vector_store %arg14[%c0_15, %c0_16], %24 {strides = array<i32>} : memref<144x512xbf16, #tpu.memory_space<vmem>>, vector<16x512xbf16>,
    %c16_i32 = arith.constant 16 : i32
    %26 = tpu.dynamic_rotate %19 by %c16_i32 dim 1 : vector<16x512xf32>, i32 -> vector<16x512xf32>
    %c1 = arith.constant 1 : index
    %c0_17 = arith.constant 0 : index
    %27 = vector.load %arg2[%c1, %c0_17] : memref<9x512xf32, #tpu.memory_space<vmem>>, vector<1x512xf32>
    %28 = vector.broadcast %27 : vector<1x512xf32> to vector<16x512xf32>
    %29 = arith.mulf %26, %28 : vector<16x512xf32>
    %30 = arith.truncf %29 : vector<16x512xf32> to vector<16x512xbf16>
    %c16 = arith.constant 16 : index
    %c0_18 = arith.constant 0 : index
    %31 = vector.load %arg14[%c16, %c0_18] : memref<144x512xbf16, #tpu.memory_space<vmem>>, vector<16x512xbf16>
    tpu.vector_store %arg14[%c16, %c0_18], %30 {strides = array<i32>} : memref<144x512xbf16, #tpu.memory_space<vmem>>, vector<16x512xbf16>,
    %c15_i32 = arith.constant 15 : i32
    %32 = tpu.dynamic_rotate %19 by %c15_i32 dim 1 : vector<16x512xf32>, i32 -> vector<16x512xf32>
    %c2 = arith.constant 2 : index
    %c0_19 = arith.constant 0 : index
    %33 = vector.load %arg2[%c2, %c0_19] : memref<9x512xf32, #tpu.memory_space<vmem>>, vector<1x512xf32>
    %34 = vector.broadcast %33 : vector<1x512xf32> to vector<16x512xf32>
    %35 = arith.mulf %32, %34 : vector<16x512xf32>
    %36 = arith.truncf %35 : vector<16x512xf32> to vector<16x512xbf16>
    %c32 = arith.constant 32 : index
    %c0_20 = arith.constant 0 : index
    %37 = vector.load %arg14[%c32, %c0_20] : memref<144x512xbf16, #tpu.memory_space<vmem>>, vector<16x512xbf16>
    tpu.vector_store %arg14[%c32, %c0_20], %36 {strides = array<i32>} : memref<144x512xbf16, #tpu.memory_space<vmem>>, vector<16x512xbf16>,
    %c1_i32 = arith.constant 1 : i32
    %38 = tpu.dynamic_rotate %19 by %c1_i32 dim 1 : vector<16x512xf32>, i32 -> vector<16x512xf32>
    %c3 = arith.constant 3 : index
    %c0_21 = arith.constant 0 : index
    %39 = vector.load %arg2[%c3, %c0_21] : memref<9x512xf32, #tpu.memory_space<vmem>>, vector<1x512xf32>
    %40 = vector.broadcast %39 : vector<1x512xf32> to vector<16x512xf32>
    %41 = arith.mulf %38, %40 : vector<16x512xf32>
    %42 = arith.truncf %41 : vector<16x512xf32> to vector<16x512xbf16>
    %c48 = arith.constant 48 : index
    %c0_22 = arith.constant 0 : index
    %43 = vector.load %arg14[%c48, %c0_22] : memref<144x512xbf16, #tpu.memory_space<vmem>>, vector<16x512xbf16>
    tpu.vector_store %arg14[%c48, %c0_22], %42 {strides = array<i32>} : memref<144x512xbf16, #tpu.memory_space<vmem>>, vector<16x512xbf16>,
    %44 = arith.truncf %19 : vector<16x512xf32> to vector<16x512xbf16>
    %c64 = arith.constant 64 : index
    %c0_23 = arith.constant 0 : index
    %45 = vector.load %arg14[%c64, %c0_23] : memref<144x512xbf16, #tpu.memory_space<vmem>>, vector<16x512xbf16>
    tpu.vector_store %arg14[%c64, %c0_23], %44 {strides = array<i32>} : memref<144x512xbf16, #tpu.memory_space<vmem>>, vector<16x512xbf16>,
    %c511_i32 = arith.constant 511 : i32
    %46 = tpu.dynamic_rotate %19 by %c511_i32 dim 1 : vector<16x512xf32>, i32 -> vector<16x512xf32>
    %c5 = arith.constant 5 : index
    %c0_24 = arith.constant 0 : index
    %47 = vector.load %arg2[%c5, %c0_24] : memref<9x512xf32, #tpu.memory_space<vmem>>, vector<1x512xf32>
    %48 = vector.broadcast %47 : vector<1x512xf32> to vector<16x512xf32>
    %49 = arith.mulf %46, %48 : vector<16x512xf32>
    %50 = arith.truncf %49 : vector<16x512xf32> to vector<16x512xbf16>
    %c80 = arith.constant 80 : index
    %c0_25 = arith.constant 0 : index
    %51 = vector.load %arg14[%c80, %c0_25] : memref<144x512xbf16, #tpu.memory_space<vmem>>, vector<16x512xbf16>
    tpu.vector_store %arg14[%c80, %c0_25], %50 {strides = array<i32>} : memref<144x512xbf16, #tpu.memory_space<vmem>>, vector<16x512xbf16>,
    %c497_i32 = arith.constant 497 : i32
    %52 = tpu.dynamic_rotate %19 by %c497_i32 dim 1 : vector<16x512xf32>, i32 -> vector<16x512xf32>
    %c6 = arith.constant 6 : index
    %c0_26 = arith.constant 0 : index
    %53 = vector.load %arg2[%c6, %c0_26] : memref<9x512xf32, #tpu.memory_space<vmem>>, vector<1x512xf32>
    %54 = vector.broadcast %53 : vector<1x512xf32> to vector<16x512xf32>
    %55 = arith.mulf %52, %54 : vector<16x512xf32>
    %56 = arith.truncf %55 : vector<16x512xf32> to vector<16x512xbf16>
    %c96 = arith.constant 96 : index
    %c0_27 = arith.constant 0 : index
    %57 = vector.load %arg14[%c96, %c0_27] : memref<144x512xbf16, #tpu.memory_space<vmem>>, vector<16x512xbf16>
    tpu.vector_store %arg14[%c96, %c0_27], %56 {strides = array<i32>} : memref<144x512xbf16, #tpu.memory_space<vmem>>, vector<16x512xbf16>,
    %c496_i32 = arith.constant 496 : i32
    %58 = tpu.dynamic_rotate %19 by %c496_i32 dim 1 : vector<16x512xf32>, i32 -> vector<16x512xf32>
    %c7 = arith.constant 7 : index
    %c0_28 = arith.constant 0 : index
    %59 = vector.load %arg2[%c7, %c0_28] : memref<9x512xf32, #tpu.memory_space<vmem>>, vector<1x512xf32>
    %60 = vector.broadcast %59 : vector<1x512xf32> to vector<16x512xf32>
    %61 = arith.mulf %58, %60 : vector<16x512xf32>
    %62 = arith.truncf %61 : vector<16x512xf32> to vector<16x512xbf16>
    %c112 = arith.constant 112 : index
    %c0_29 = arith.constant 0 : index
    %63 = vector.load %arg14[%c112, %c0_29] : memref<144x512xbf16, #tpu.memory_space<vmem>>, vector<16x512xbf16>
    tpu.vector_store %arg14[%c112, %c0_29], %62 {strides = array<i32>} : memref<144x512xbf16, #tpu.memory_space<vmem>>, vector<16x512xbf16>,
    %c495_i32 = arith.constant 495 : i32
    %64 = tpu.dynamic_rotate %19 by %c495_i32 dim 1 : vector<16x512xf32>, i32 -> vector<16x512xf32>
    %c8 = arith.constant 8 : index
    %c0_30 = arith.constant 0 : index
    %65 = vector.load %arg2[%c8, %c0_30] : memref<9x512xf32, #tpu.memory_space<vmem>>, vector<1x512xf32>
    %66 = vector.broadcast %65 : vector<1x512xf32> to vector<16x512xf32>
    %67 = arith.mulf %64, %66 : vector<16x512xf32>
    %68 = arith.truncf %67 : vector<16x512xf32> to vector<16x512xbf16>
    %c128 = arith.constant 128 : index
    %c0_31 = arith.constant 0 : index
    %69 = vector.load %arg14[%c128, %c0_31] : memref<144x512xbf16, #tpu.memory_space<vmem>>, vector<16x512xbf16>
    tpu.vector_store %arg14[%c128, %c0_31], %68 {strides = array<i32>} : memref<144x512xbf16, #tpu.memory_space<vmem>>, vector<16x512xbf16>,
    %c0_32 = arith.constant 0 : index
    %c0_33 = arith.constant 0 : index
    %70 = vector.load %arg8[%c0_32, %c0_33] : memref<16x144xbf16, #tpu.memory_space<vmem>>, vector<16x144xbf16>
    %c0_34 = arith.constant 0 : index
    %c0_35 = arith.constant 0 : index
    %71 = vector.load %arg14[%c0_34, %c0_35] : memref<144x512xbf16, #tpu.memory_space<vmem>>, vector<144x512xbf16>
    %cst_36 = arith.constant dense<0.000000e+00> : vector<16x512xf32>
    %72 = tpu.matmul %70, %71, %cst_36 {dimension_numbers = #tpu.dot_dimension_numbers<[1], [0], [0], [1], [0, 0, 1, 1], [], []>} : vector<16x144xbf16>, vector<144x512xbf16>, vector<16x512xf32> -> vector<16x512xf32>
    %c0_37 = arith.constant 0 : index
    %c0_38 = arith.constant 0 : index
    %73 = vector.load %arg9[%c0_37, %c0_38] : memref<16x1xf32, #tpu.memory_space<vmem>>, vector<16x1xf32>
    %74 = vector.broadcast %73 : vector<16x1xf32> to vector<16x512xf32>
    %75 = arith.mulf %72, %74 : vector<16x512xf32>
    %c0_39 = arith.constant 0 : index
    %c0_40 = arith.constant 0 : index
    %76 = vector.load %arg10[%c0_39, %c0_40] : memref<16x1xf32, #tpu.memory_space<vmem>>, vector<16x1xf32>
    %77 = vector.broadcast %76 : vector<16x1xf32> to vector<16x512xf32>
    %78 = arith.addf %75, %77 : vector<16x512xf32>
    %cst_41 = arith.constant 0.000000e+00 : f32
    %79 = vector.broadcast %cst_41 : f32 to vector<16x512xf32>
    %80 = arith.maximumf %78, %79 : vector<16x512xf32>
    %c0_42 = arith.constant 0 : index
    %c0_43 = arith.constant 0 : index
    %81 = vector.load %arg11[%c0_42, %c0_43] : memref<8x16xbf16, #tpu.memory_space<vmem>>, vector<8x16xbf16>
    %82 = arith.truncf %80 : vector<16x512xf32> to vector<16x512xbf16>
    %cst_44 = arith.constant dense<0.000000e+00> : vector<8x512xf32>
    %83 = tpu.matmul %81, %82, %cst_44 {dimension_numbers = #tpu.dot_dimension_numbers<[1], [0], [0], [1], [0, 0, 1, 1], [], []>} : vector<8x16xbf16>, vector<16x512xbf16>, vector<8x512xf32> -> vector<8x512xf32>
    %c0_45 = arith.constant 0 : index
    %c0_46 = arith.constant 0 : index
    %84 = vector.load %arg12[%c0_45, %c0_46] : memref<8x1xf32, #tpu.memory_space<vmem>>, vector<8x1xf32>
    %85 = vector.broadcast %84 : vector<8x1xf32> to vector<8x512xf32>
    %86 = arith.addf %83, %85 : vector<8x512xf32>
    %c0_47 = arith.constant 0 : index
    %c0_48 = arith.constant 0 : index
    %87 = vector.load %arg1[%c0_47, %c0_48] : memref<8x512xf32, #tpu.memory_space<vmem>>, vector<8x512xf32>
    %88 = arith.addf %86, %87 : vector<8x512xf32>
    %c0_49 = arith.constant 0 : index
    %c0_50 = arith.constant 0 : index
    %89 = vector.load %arg13[%c0_49, %c0_50] : memref<8x512xf32, #tpu.memory_space<vmem>>, vector<8x512xf32>
    tpu.vector_store %arg13[%c0_49, %c0_50], %88 {strides = array<i32>} : memref<8x512xf32, #tpu.memory_space<vmem>>, vector<8x512xf32>,
    return
  }
  func.func @transform_0(%arg0: i32) -> (i32, i32) {
    %c0_i32 = arith.constant 0 : i32
    %c0_i32_0 = arith.constant 0 : i32
    return %c0_i32, %arg0 : i32, i32
  }
  func.func @transform_1(%arg0: i32) -> (i32, i32) {
    %c0_i32 = arith.constant 0 : i32
    %c0_i32_0 = arith.constant 0 : i32
    %c0_i32_1 = arith.constant 0 : i32
    return %c0_i32, %c0_i32_0 : i32, i32
  }
  func.func @transform_2(%arg0: i32) -> (i32, i32) {
    %c0_i32 = arith.constant 0 : i32
    %c0_i32_0 = arith.constant 0 : i32
    %c0_i32_1 = arith.constant 0 : i32
    return %c0_i32, %c0_i32_0 : i32, i32
  }
  func.func @transform_3(%arg0: i32) -> (i32, i32) {
    %c0_i32 = arith.constant 0 : i32
    %c0_i32_0 = arith.constant 0 : i32
    %c0_i32_1 = arith.constant 0 : i32
    return %c0_i32, %c0_i32_0 : i32, i32
  }
  func.func @transform_4(%arg0: i32) -> (i32, i32) {
    %c0_i32 = arith.constant 0 : i32
    %c0_i32_0 = arith.constant 0 : i32
    %c0_i32_1 = arith.constant 0 : i32
    return %c0_i32, %c0_i32_0 : i32, i32
  }
  func.func @transform_5(%arg0: i32) -> (i32, i32) {
    %c0_i32 = arith.constant 0 : i32
    %c0_i32_0 = arith.constant 0 : i32
    %c0_i32_1 = arith.constant 0 : i32
    return %c0_i32, %c0_i32_0 : i32, i32
  }
  func.func @transform_6(%arg0: i32) -> (i32, i32) {
    %c0_i32 = arith.constant 0 : i32
    %c0_i32_0 = arith.constant 0 : i32
    %c0_i32_1 = arith.constant 0 : i32
    return %c0_i32, %c0_i32_0 : i32, i32
  }
  func.func @transform_7(%arg0: i32) -> (i32, i32) {
    %c0_i32 = arith.constant 0 : i32
    %c0_i32_0 = arith.constant 0 : i32
    %c0_i32_1 = arith.constant 0 : i32
    return %c0_i32, %c0_i32_0 : i32, i32
  }
  func.func @transform_8(%arg0: i32) -> (i32, i32) {
    %c0_i32 = arith.constant 0 : i32
    %c0_i32_0 = arith.constant 0 : i32
    %c0_i32_1 = arith.constant 0 : i32
    return %c0_i32, %c0_i32_0 : i32, i32
  }
  func.func @transform_9(%arg0: i32) -> (i32, i32) {
    %c0_i32 = arith.constant 0 : i32
    %c0_i32_0 = arith.constant 0 : i32
    %c0_i32_1 = arith.constant 0 : i32
    return %c0_i32, %c0_i32_0 : i32, i32
  }
  func.func @transform_10(%arg0: i32) -> (i32, i32) {
    %c0_i32 = arith.constant 0 : i32
    %c0_i32_0 = arith.constant 0 : i32
    %c0_i32_1 = arith.constant 0 : i32
    return %c0_i32, %c0_i32_0 : i32, i32
  }
  func.func @transform_11(%arg0: i32) -> (i32, i32) {
    %c0_i32 = arith.constant 0 : i32
    %c0_i32_0 = arith.constant 0 : i32
    %c0_i32_1 = arith.constant 0 : i32
    return %c0_i32, %c0_i32_0 : i32, i32
  }
  func.func @transform_12(%arg0: i32) -> (i32, i32) {
    %c0_i32 = arith.constant 0 : i32
    %c0_i32_0 = arith.constant 0 : i32
    return %c0_i32, %arg0 : i32, i32
  }
}

</mosaic_0001>

<llo_original>
// kernel: tpu_custom_call.1
$region0: #{tpu_custom_call.1}
  #allocation0 [shape = 'u32[]', space=smem, size = 0x4, offset = 0x4, fixed_abs, tag = 'smem constant byte address 0x4 - core index']
  #allocation1 [shape = 'u32[144,128]{1,0:T(1,128)}', space=vmem, size = 0x12000, scoped, tag = 'internal scratch']
  #allocation2 [shape = 'bf16[144,512]{1,0:T(8,128)(2,1)}', space=vmem, size = 0x24000, scoped, tag = 'scratch operand']
  %s0 = inlined_call_operand.vmem [shape: f32[8,512], index: 0, kind: input, shape index: {}]
  %s1 = inlined_call_operand.vmem [shape: f32[9,512], index: 1, kind: input, shape index: {}]
  %s2 = inlined_call_operand.vmem [shape: f32[8,1], index: 2, kind: input, shape index: {}]
  %s3 = inlined_call_operand.vmem [shape: f32[8,1], index: 3, kind: input, shape index: {}]
  %s4 = inlined_call_operand.vmem [shape: bf16[16,8], index: 4, kind: input, shape index: {}]
  %s5 = inlined_call_operand.vmem [shape: f32[16,1], index: 5, kind: input, shape index: {}]
  %s6 = inlined_call_operand.vmem [shape: f32[16,1], index: 6, kind: input, shape index: {}]
  %s7 = inlined_call_operand.vmem [shape: bf16[16,144], index: 7, kind: input, shape index: {}]
  %s8 = inlined_call_operand.vmem [shape: f32[16,1], index: 8, kind: input, shape index: {}]
  %s9 = inlined_call_operand.vmem [shape: f32[16,1], index: 9, kind: input, shape index: {}]
  %s10 = inlined_call_operand.vmem [shape: bf16[8,16], index: 10, kind: input, shape index: {}]
  %s11 = inlined_call_operand.vmem [shape: f32[8,1], index: 11, kind: input, shape index: {}]
  %s12 = inlined_call_operand.hbm [shape: f32[8,512], index: 12, kind: output, shape index: {}]
  %s13 = sld [smem:[#allocation0]]
  $region58: #{tpu_custom_call.1} parent=0
    _
  %s15 = ssub.s32 1, %s13
  %s16 = scalar_select 0, %s15, %s13
  $region1: #{tpu_custom_call.1} parent=0
    #allocation3 [shape = 'u8[16384]{0}', space=vmem, size = 0x4000, scoped, tag = 'output window, operand 0, single buffered']
    #allocation4 [shape = 's32[1]{0}', space=sflag, size = 0x4, scoped, tag = 'scoped memory for tpu_custom_call.1']
    %17 = vsyncpa [#allocation4], 0
    // Predicated region
    $region2: #{tpu_custom_call.1} parent=1 // pred_check
      _
    $region3: #{tpu_custom_call.1} parent=1 // pred_check_branch
      %19 = sbr.rel (0) target = $region5
    $region4: #{tpu_custom_call.1} parent=1 // pred_region
      _
    $region5: #{tpu_custom_call.1} parent=1 // pred_fallthru
      _
    // Predicated region
    $region6: #{tpu_custom_call.1} parent=1 // pred_check
      _
    $region7: #{tpu_custom_call.1} parent=1 // pred_check_branch
      %21 = sbr.rel (0) target = $region9
    $region8: #{tpu_custom_call.1} parent=1 // pred_region
      _
    $region9: #{tpu_custom_call.1} parent=1 // pred_fallthru
      _
    // Predicated region
    $region10: #{tpu_custom_call.1} parent=1 // pred_check
      _
    $region11: #{tpu_custom_call.1} parent=1 // pred_check_branch
      %23 = sbr.rel (0) target = $region13
    $region12: #{tpu_custom_call.1} parent=1 // pred_region
      _
    $region13: #{tpu_custom_call.1} parent=1 // pred_fallthru
      _
    // Predicated region
    $region14: #{tpu_custom_call.1} parent=1 // pred_check
      _
    $region15: #{tpu_custom_call.1} parent=1 // pred_check_branch
      %25 = sbr.rel (0) target = $region17
    $region16: #{tpu_custom_call.1} parent=1 // pred_region
      _
    $region17: #{tpu_custom_call.1} parent=1 // pred_fallthru
      _
    // Predicated region
    $region18: #{tpu_custom_call.1} parent=1 // pred_check
      _
    $region19: #{tpu_custom_call.1} parent=1 // pred_check_branch
      %27 = sbr.rel (0) target = $region21
    $region20: #{tpu_custom_call.1} parent=1 // pred_region
      _
    $region21: #{tpu_custom_call.1} parent=1 // pred_fallthru
      _
    // Predicated region
    $region22: #{tpu_custom_call.1} parent=1 // pred_check
      _
    $region23: #{tpu_custom_call.1} parent=1 // pred_check_branch
      %29 = sbr.rel (0) target = $region25
    $region24: #{tpu_custom_call.1} parent=1 // pred_region
      _
    $region25: #{tpu_custom_call.1} parent=1 // pred_fallthru
      _
    // Predicated region
    $region26: #{tpu_custom_call.1} parent=1 // pred_check
      _
    $region27: #{tpu_custom_call.1} parent=1 // pred_check_branch
      %31 = sbr.rel (0) target = $region29
    $region28: #{tpu_custom_call.1} parent=1 // pred_region
      _
    $region29: #{tpu_custom_call.1} parent=1 // pred_fallthru
      _
    // Predicated region
    $region30: #{tpu_custom_call.1} parent=1 // pred_check
      _
    $region31: #{tpu_custom_call.1} parent=1 // pred_check_branch
      %33 = sbr.rel (0) target = $region33
    $region32: #{tpu_custom_call.1} parent=1 // pred_region
      _
    $region33: #{tpu_custom_call.1} parent=1 // pred_fallthru
      _
    // Predicated region
    $region34: #{tpu_custom_call.1} parent=1 // pred_check
      _
    $region35: #{tpu_custom_call.1} parent=1 // pred_check_branch
      %35 = sbr.rel (0) target = $region37
    $region36: #{tpu_custom_call.1} parent=1 // pred_region
      _
    $region37: #{tpu_custom_call.1} parent=1 // pred_fallthru
      _
    // Predicated region
    $region38: #{tpu_custom_call.1} parent=1 // pred_check
      _
    $region39: #{tpu_custom_call.1} parent=1 // pred_check_branch
      %37 = sbr.rel (0) target = $region41
    $region40: #{tpu_custom_call.1} parent=1 // pred_region
      _
    $region41: #{tpu_custom_call.1} parent=1 // pred_fallthru
      _
    // Predicated region
    $region42: #{tpu_custom_call.1} parent=1 // pred_check
      _
    $region43: #{tpu_custom_call.1} parent=1 // pred_check_branch
      %39 = sbr.rel (0) target = $region45
    $region44: #{tpu_custom_call.1} parent=1 // pred_region
      _
    $region45: #{tpu_custom_call.1} parent=1 // pred_fallthru
      _
    // Predicated region
    $region46: #{tpu_custom_call.1} parent=1 // pred_check
      _
    $region47: #{tpu_custom_call.1} parent=1 // pred_check_branch
      %41 = sbr.rel (0) target = $region49
    $region48: #{tpu_custom_call.1} parent=1 // pred_region
      _
    $region49: #{tpu_custom_call.1} parent=1 // pred_fallthru
      _
    %v43 = vld [vmem:[%s0] sm:$0xff]
    %v44 = vld [vmem:[%s0 + $0x8] sm:$0xff]
    %v45 = vld [vmem:[%s0 + $0x10] sm:$0xff]
    %v46 = vld [vmem:[%s0 + $0x18] sm:$0xff]
    %v47 = vld [vmem:[%s2] sm:$0xff]
    %49 = vset.pattern.permute.xlu0 0
    %50 = vperm.xlu0 %49, %v47
    %v51 = vpop.permute.xlu0 %50
    %v53 = vmul.f32 %v43, %v51
    %v54 = vmul.f32 %v44, %v51
    %v55 = vmul.f32 %v45, %v51
    %v56 = vmul.f32 %v46, %v51
    %v57 = vld [vmem:[%s3] sm:$0xff]
    %59 = vset.pattern.permute.xlu0 0
    %60 = vperm.xlu0 %59, %v57
    %v61 = vpop.permute.xlu0 %60
    %v63 = vadd.f32 %v53, %v61
    %v64 = vadd.f32 %v54, %v61
    %v65 = vadd.f32 %v55, %v61
    %v66 = vadd.f32 %v56, %v61
    %v67 = vmax.f32 %v63, 0.0
    %v68 = vmax.f32 %v64, 0.0
    %v69 = vmax.f32 %v65, 0.0
    %v70 = vmax.f32 %v66, 0.0
    %v71 = vld [vmem:[%s4] sm:$0xf]
    %v72 = vld [vmem:[%s4 + $0x4] sm:$0xf]
    %v73 = vpack.c.bf16 %v67, %v67
    %v74 = vpack.c.bf16 %v68, %v68
    %v75 = vpack.c.bf16 %v69, %v69
    %v76 = vpack.c.bf16 %v70, %v70
    %v79 = vunpack.c.l.b16 %v71
    %v80 = vunpack.c.l.b16 %v72
    %v81 = vpack.c.b16 %v80, %v79
    %vm82 = vcmask 64512
    %v84 = vsel %vm82, %v81, 0
    %vm86 = vcmask 1043456
    %v88 = vsel %vm86, %v73, 0
    %v91 = vsel %vm86, %v74, 0
    %v94 = vsel %vm86, %v75, 0
    %v97 = vsel %vm86, %v76, 0
    %99 = vmatprep.subr.bf16.mxu0 0
    %100 = vmatpush1.bf16.msra.mxu0 0
    %101 = vmatprep.subr.bf16.mxu0 0
    %102 = vmatpush1.bf16.msra.mxu0 0
    %103 = vmatprep.subr.bf16.mxu0 0
    %104 = vmatpush1.bf16.msra.mxu0 0
    %105 = vmatprep.subr.bf16.mxu0 0
    %106 = vmatpush1.bf16.msra.mxu0 0
    %107 = vmatprep.subr.bf16.mxu0 0
    %108 = vmatpush1.bf16.msra.mxu0 0
    %109 = vmatprep.subr.bf16.mxu0 0
    %110 = vmatpush1.bf16.msra.mxu0 0
    %111 = vmatprep.subr.bf16.mxu0 0
    %112 = vmatpush1.bf16.msra.mxu0 0
    %113 = vmatprep.subr.bf16.mxu0 %v91
    %114 = vmatpush1.bf16.msra.mxu0 %v88
    %115 = vmatprep.subr.bf16.mxu0 0
    %116 = vmatpush2.bf16.msra.mxu0 0
    %117 = vmatprep.subr.bf16.mxu0 0
    %118 = vmatpush2.bf16.msra.mxu0 0
    %119 = vmatprep.subr.bf16.mxu0 0
    %120 = vmatpush2.bf16.msra.mxu0 0
    %121 = vmatprep.subr.bf16.mxu0 0
    %122 = vmatpush2.bf16.msra.mxu0 0
    %123 = vmatprep.subr.bf16.mxu0 0
    %124 = vmatpush2.bf16.msra.mxu0 0
    %125 = vmatprep.subr.bf16.mxu0 0
    %126 = vmatpush2.bf16.msra.mxu0 0
    %127 = vmatprep.subr.bf16.mxu0 0
    %128 = vmatpush2.bf16.msra.mxu0 0
    %129 = vmatprep.subr.bf16.mxu0 0
    %130 = vmatpush2.bf16.msra.mxu0 0
    %131 = vmatprep.mubr.bf16.mxu0 0
    %132 = vmatmul.mubr.bf16.gmra.mxu0 %v84
    %v133 = vpop.f32.mrf.mxu0
    %v134 = vadd.f32 0.0, %v133
    %v135 = vpop.f32.mrf.mxu0
    %v136 = vadd.f32 0.0, %v135
    %v137 = vpop.f32.mrf.mxu0
    %v138 = vadd.f32 0.0, %v137
    %v139 = vpop.f32.mrf.mxu0
    %v140 = vadd.f32 0.0, %v139
    %141 = vdwg.mxu0
    %142 = vmatprep.subr.bf16.mxu0 0
    %143 = vmatpush1.bf16.msra.mxu0 0
    %144 = vmatprep.subr.bf16.mxu0 0
    %145 = vmatpush1.bf16.msra.mxu0 0
    %146 = vmatprep.subr.bf16.mxu0 0
    %147 = vmatpush1.bf16.msra.mxu0 0
    %148 = vmatprep.subr.bf16.mxu0 0
    %149 = vmatpush1.bf16.msra.mxu0 0
    %150 = vmatprep.subr.bf16.mxu0 0
    %151 = vmatpush1.bf16.msra.mxu0 0
    %152 = vmatprep.subr.bf16.mxu0 0
    %153 = vmatpush1.bf16.msra.mxu0 0
    %154 = vmatprep.subr.bf16.mxu0 0
    %155 = vmatpush1.bf16.msra.mxu0 0
    %156 = vmatprep.subr.bf16.mxu0 %v97
    %157 = vmatpush1.bf16.msra.mxu0 %v94
    %158 = vmatprep.subr.bf16.mxu0 0
    %159 = vmatpush2.bf16.msra.mxu0 0
    %160 = vmatprep.subr.bf16.mxu0 0
    %161 = vmatpush2.bf16.msra.mxu0 0
    %162 = vmatprep.subr.bf16.mxu0 0
    %163 = vmatpush2.bf16.msra.mxu0 0
    %164 = vmatprep.subr.bf16.mxu0 0
    %165 = vmatpush2.bf16.msra.mxu0 0
    %166 = vmatprep.subr.bf16.mxu0 0
    %167 = vmatpush2.bf16.msra.mxu0 0
    %168 = vmatprep.subr.bf16.mxu0 0
    %169 = vmatpush2.bf16.msra.mxu0 0
    %170 = vmatprep.subr.bf16.mxu0 0
    %171 = vmatpush2.bf16.msra.mxu0 0
    %172 = vmatprep.subr.bf16.mxu0 0
    %173 = vmatpush2.bf16.msra.mxu0 0
    %174 = vmatprep.mubr.bf16.mxu0 0
    %175 = vmatmul.mubr.bf16.gmra.mxu0 %v84
    %v176 = vpop.f32.mrf.mxu0
    %v177 = vadd.f32 0.0, %v176
    %v178 = vpop.f32.mrf.mxu0
    %v179 = vadd.f32 0.0, %v178
    %v180 = vpop.f32.mrf.mxu0
    %v181 = vadd.f32 0.0, %v180
    %v182 = vpop.f32.mrf.mxu0
    %v183 = vadd.f32 0.0, %v182
    %184 = vdwg.mxu0
    %v185 = vld [vmem:[%s5] sm:$0xff]
    %v186 = vld [vmem:[%s5 + $0x8] sm:$0xff]
    %188 = vset.pattern.permute.xlu0 0
    %189 = vperm.xlu0 %188, %v185
    %v190 = vpop.permute.xlu0 %189
    %193 = vset.pattern.permute.xlu0 0
    %194 = vperm.xlu0 %193, %v186
    %v195 = vpop.permute.xlu0 %194
    %v197 = vmul.f32 %v134, %v190
    %v198 = vmul.f32 %v136, %v190
    %v199 = vmul.f32 %v177, %v190
    %v200 = vmul.f32 %v179, %v190
    %v201 = vmul.f32 %v138, %v195
    %v202 = vmul.f32 %v140, %v195
    %v203 = vmul.f32 %v181, %v195
    %v204 = vmul.f32 %v183, %v195
    %v205 = vld [vmem:[%s6] sm:$0xff]
    %v206 = vld [vmem:[%s6 + $0x8] sm:$0xff]
    %208 = vset.pattern.permute.xlu0 0
    %209 = vperm.xlu0 %208, %v205
    %v210 = vpop.permute.xlu0 %209
    %213 = vset.pattern.permute.xlu0 0
    %214 = vperm.xlu0 %213, %v206
    %v215 = vpop.permute.xlu0 %214
    %v217 = vadd.f32 %v197, %v210
    %v218 = vadd.f32 %v198, %v210
    %v219 = vadd.f32 %v199, %v210
    %v220 = vadd.f32 %v200, %v210
    %v221 = vadd.f32 %v201, %v215
    %v222 = vadd.f32 %v202, %v215
    %v223 = vadd.f32 %v203, %v215
    %v224 = vadd.f32 %v204, %v215
    %v225 = vmax.f32 %v217, 0.0
    %v226 = vmax.f32 %v218, 0.0
    %v227 = vmax.f32 %v219, 0.0
    %v228 = vmax.f32 %v220, 0.0
    %v229 = vmax.f32 %v221, 0.0
    %v230 = vmax.f32 %v222, 0.0
    %v231 = vmax.f32 %v223, 0.0
    %v232 = vmax.f32 %v224, 0.0
    %233 = vrot.lane.b32.xlu0 %v225, 17
    %v234 = vpop.permute.xlu0 %233
    %235 = vrot.lane.b32.xlu0 %v229, 17
    %v236 = vpop.permute.xlu0 %235
    %237 = vrot.lane.b32.xlu0 %v226, 17
    %v238 = vpop.permute.xlu0 %237
    %239 = vrot.lane.b32.xlu0 %v230, 17
    %v240 = vpop.permute.xlu0 %239
    %241 = vrot.lane.b32.xlu0 %v227, 17
    %v242 = vpop.permute.xlu0 %241
    %243 = vrot.lane.b32.xlu0 %v231, 17
    %v244 = vpop.permute.xlu0 %243
    %245 = vrot.lane.b32.xlu0 %v228, 17
    %v246 = vpop.permute.xlu0 %245
    %247 = vrot.lane.b32.xlu0 %v232, 17
    %v248 = vpop.permute.xlu0 %247
    %v249 = vlaneseq
    %v250 = vand.u32 %v249, 127
    %vm251 = vcmp.lt.s32.totalorder %v250, 17
    %v252 = vsel %vm251, %v242, %v246
    %v253 = vsel %vm251, %v244, %v248
    %v254 = vsel %vm251, %v238, %v242
    %v255 = vsel %vm251, %v240, %v244
    %v256 = vsel %vm251, %v234, %v238
    %v257 = vsel %vm251, %v236, %v240
    %v258 = vsel %vm251, %v246, %v234
    %v259 = vsel %vm251, %v248, %v236
    %v260 = vld [vmem:[%s1] ss:$8 sm:$0xf]
    %v262 = vlaneseq
    %v263 = vshrl.u32 %v262, 7
    %v264 = vsub.s32 0, %v263
    %v265 = vrot.slane %v260, %v264
    %v266 = vlaneseq
    %v267 = vshrl.u32 %v266, 7
    %v268 = vsub.s32 1, %v267
    %v269 = vrot.slane %v260, %v268
    %v270 = vlaneseq
    %v271 = vshrl.u32 %v270, 7
    %v272 = vsub.s32 2, %v271
    %v273 = vrot.slane %v260, %v272
    %v274 = vlaneseq
    %v275 = vshrl.u32 %v274, 7
    %v276 = vsub.s32 3, %v275
    %v277 = vrot.slane %v260, %v276
    %v282 = vmul.f32 %v258, %v265
    %v283 = vmul.f32 %v256, %v269
    %v284 = vmul.f32 %v254, %v273
    %v285 = vmul.f32 %v252, %v277
    %v286 = vmul.f32 %v259, %v265
    %v287 = vmul.f32 %v257, %v269
    %v288 = vmul.f32 %v255, %v273
    %v289 = vmul.f32 %v253, %v277
    %v290 = vpack.c.bf16 %v286, %v282
    %v291 = vpack.c.bf16 %v287, %v283
    %v292 = vpack.c.bf16 %v288, %v284
    %v293 = vpack.c.bf16 %v289, %v285
    %v298 = vunpack.c.l.b16 %v290
    %v299 = vunpack.c.l.b16 %v291
    %v300 = vunpack.c.l.b16 %v292
    %v301 = vunpack.c.l.b16 %v293
    %v302 = vunpack.c.h.b16 %v290
    %v303 = vunpack.c.h.b16 %v291
    %v304 = vunpack.c.h.b16 %v292
    %v305 = vunpack.c.h.b16 %v293
    %v306 = vpack.c.b16 %v299, %v298
    %v307 = vpack.c.b16 %v301, %v300
    %v308 = vpack.c.b16 %v303, %v302
    %v309 = vpack.c.b16 %v305, %v304
    %314 = vst [vmem:[#allocation2] sm:$0xff] %v306
    %315 = vst [vmem:[#allocation2 + $0x8] sm:$0xff] %v307
    %316 = vst [vmem:[#allocation2 + $0x10] sm:$0xff] %v308
    %317 = vst [vmem:[#allocation2 + $0x18] sm:$0xff] %v309
    %318 = vrot.lane.b32.xlu0 %v225, 16
    %v319 = vpop.permute.xlu0 %318
    %320 = vrot.lane.b32.xlu0 %v229, 16
    %v321 = vpop.permute.xlu0 %320
    %322 = vrot.lane.b32.xlu0 %v226, 16
    %v323 = vpop.permute.xlu0 %322
    %324 = vrot.lane.b32.xlu0 %v230, 16
    %v325 = vpop.permute.xlu0 %324
    %326 = vrot.lane.b32.xlu0 %v227, 16
    %v327 = vpop.permute.xlu0 %326
    %328 = vrot.lane.b32.xlu0 %v231, 16
    %v329 = vpop.permute.xlu0 %328
    %330 = vrot.lane.b32.xlu0 %v228, 16
    %v331 = vpop.permute.xlu0 %330
    %332 = vrot.lane.b32.xlu0 %v232, 16
    %v333 = vpop.permute.xlu0 %332
    %vm334 = vcmp.lt.s32.totalorder %v250, 16
    %v335 = vsel %vm334, %v327, %v331
    %v336 = vsel %vm334, %v329, %v333
    %v337 = vsel %vm334, %v323, %v327
    %v338 = vsel %vm334, %v325, %v329
    %v339 = vsel %vm334, %v319, %v323
    %v340 = vsel %vm334, %v321, %v325
    %v341 = vsel %vm334, %v331, %v319
    %v342 = vsel %vm334, %v333, %v321
    %s343 = scalar_lea.vmem %s1, 1
    %v344 = vld [vmem:[%s343] ss:$8 sm:$0xf]
    %v346 = vlaneseq
    %v347 = vshrl.u32 %v346, 7
    %v348 = vsub.s32 0, %v347
    %v349 = vrot.slane %v344, %v348
    %v350 = vlaneseq
    %v351 = vshrl.u32 %v350, 7
    %v352 = vsub.s32 1, %v351
    %v353 = vrot.slane %v344, %v352
    %v354 = vlaneseq
    %v355 = vshrl.u32 %v354, 7
    %v356 = vsub.s32 2, %v355
    %v357 = vrot.slane %v344, %v356
    %v358 = vlaneseq
    %v359 = vshrl.u32 %v358, 7
    %v360 = vsub.s32 3, %v359
    %v361 = vrot.slane %v344, %v360
    %v366 = vmul.f32 %v341, %v349
    %v367 = vmul.f32 %v339, %v353
    %v368 = vmul.f32 %v337, %v357
    %v369 = vmul.f32 %v335, %v361
    %v370 = vmul.f32 %v342, %v349
    %v371 = vmul.f32 %v340, %v353
    %v372 = vmul.f32 %v338, %v357
    %v373 = vmul.f32 %v336, %v361
    %v374 = vpack.c.bf16 %v370, %v366
    %v375 = vpack.c.bf16 %v371, %v367
    %v376 = vpack.c.bf16 %v372, %v368
    %v377 = vpack.c.bf16 %v373, %v369
    %v382 = vunpack.c.l.b16 %v374
    %v383 = vunpack.c.l.b16 %v375
    %v384 = vunpack.c.l.b16 %v376
    %v385 = vunpack.c.l.b16 %v377
    %v386 = vunpack.c.h.b16 %v374
    %v387 = vunpack.c.h.b16 %v375
    %v388 = vunpack.c.h.b16 %v376
    %v389 = vunpack.c.h.b16 %v377
    %v390 = vpack.c.b16 %v383, %v382
    %v391 = vpack.c.b16 %v385, %v384
    %v392 = vpack.c.b16 %v387, %v386
    %v393 = vpack.c.b16 %v389, %v388
    %398 = vst [vmem:[#allocation2 + $0x20] sm:$0xff] %v390
    %399 = vst [vmem:[#allocation2 + $0x28] sm:$0xff] %v391
    %400 = vst [vmem:[#allocation2 + $0x30] sm:$0xff] %v392
    %401 = vst [vmem:[#allocation2 + $0x38] sm:$0xff] %v393
    %402 = vrot.lane.b32.xlu0 %v225, 15
    %v403 = vpop.permute.xlu0 %402
    %404 = vrot.lane.b32.xlu0 %v229, 15
    %v405 = vpop.permute.xlu0 %404
    %406 = vrot.lane.b32.xlu0 %v226, 15
    %v407 = vpop.permute.xlu0 %406
    %408 = vrot.lane.b32.xlu0 %v230, 15
    %v409 = vpop.permute.xlu0 %408
    %410 = vrot.lane.b32.xlu0 %v227, 15
    %v411 = vpop.permute.xlu0 %410
    %412 = vrot.lane.b32.xlu0 %v231, 15
    %v413 = vpop.permute.xlu0 %412
    %414 = vrot.lane.b32.xlu0 %v228, 15
    %v415 = vpop.permute.xlu0 %414
    %416 = vrot.lane.b32.xlu0 %v232, 15
    %v417 = vpop.permute.xlu0 %416
    %vm418 = vcmp.lt.s32.totalorder %v250, 15
    %v419 = vsel %vm418, %v411, %v415
    %v420 = vsel %vm418, %v413, %v417
    %v421 = vsel %vm418, %v407, %v411
    %v422 = vsel %vm418, %v409, %v413
    %v423 = vsel %vm418, %v403, %v407
    %v424 = vsel %vm418, %v405, %v409
    %v425 = vsel %vm418, %v415, %v403
    %v426 = vsel %vm418, %v417, %v405
    %s427 = scalar_lea.vmem %s1, 2
    %v428 = vld [vmem:[%s427] ss:$8 sm:$0xf]
    %v430 = vlaneseq
    %v431 = vshrl.u32 %v430, 7
    %v432 = vsub.s32 0, %v431
    %v433 = vrot.slane %v428, %v432
    %v434 = vlaneseq
    %v435 = vshrl.u32 %v434, 7
    %v436 = vsub.s32 1, %v435
    %v437 = vrot.slane %v428, %v436
    %v438 = vlaneseq
    %v439 = vshrl.u32 %v438, 7
    %v440 = vsub.s32 2, %v439
    %v441 = vrot.slane %v428, %v440
    %v442 = vlaneseq
    %v443 = vshrl.u32 %v442, 7
    %v444 = vsub.s32 3, %v443
    %v445 = vrot.slane %v428, %v444
    %v450 = vmul.f32 %v425, %v433
    %v451 = vmul.f32 %v423, %v437
    %v452 = vmul.f32 %v421, %v441
    %v453 = vmul.f32 %v419, %v445
    %v454 = vmul.f32 %v426, %v433
    %v455 = vmul.f32 %v424, %v437
    %v456 = vmul.f32 %v422, %v441
    %v457 = vmul.f32 %v420, %v445
    %v458 = vpack.c.bf16 %v454, %v450
    %v459 = vpack.c.bf16 %v455, %v451
    %v460 = vpack.c.bf16 %v456, %v452
    %v461 = vpack.c.bf16 %v457, %v453
    %v466 = vunpack.c.l.b16 %v458
    %v467 = vunpack.c.l.b16 %v459
    %v468 = vunpack.c.l.b16 %v460
    %v469 = vunpack.c.l.b16 %v461
    %v470 = vunpack.c.h.b16 %v458
    %v471 = vunpack.c.h.b16 %v459
    %v472 = vunpack.c.h.b16 %v460
    %v473 = vunpack.c.h.b16 %v461
    %v474 = vpack.c.b16 %v467, %v466
    %v475 = vpack.c.b16 %v469, %v468
    %v476 = vpack.c.b16 %v471, %v470
    %v477 = vpack.c.b16 %v473, %v472
    %482 = vst [vmem:[#allocation2 + $0x40] sm:$0xff] %v474
    %483 = vst [vmem:[#allocation2 + $0x48] sm:$0xff] %v475
    %484 = vst [vmem:[#allocation2 + $0x50] sm:$0xff] %v476
    %485 = vst [vmem:[#allocation2 + $0x58] sm:$0xff] %v477
    %486 = vrot.lane.b32.xlu0 %v225, 1
    %v487 = vpop.permute.xlu0 %486
    %488 = vrot.lane.b32.xlu0 %v229, 1
    %v489 = vpop.permute.xlu0 %488
    %490 = vrot.lane.b32.xlu0 %v226, 1
    %v491 = vpop.permute.xlu0 %490
    %492 = vrot.lane.b32.xlu0 %v230, 1
    %v493 = vpop.permute.xlu0 %492
    %494 = vrot.lane.b32.xlu0 %v227, 1
    %v495 = vpop.permute.xlu0 %494
    %496 = vrot.lane.b32.xlu0 %v231, 1
    %v497 = vpop.permute.xlu0 %496
    %498 = vrot.lane.b32.xlu0 %v228, 1
    %v499 = vpop.permute.xlu0 %498
    %500 = vrot.lane.b32.xlu0 %v232, 1
    %v501 = vpop.permute.xlu0 %500
    %vm502 = vcmp.lt.s32.totalorder %v250, 1
    %v503 = vsel %vm502, %v495, %v499
    %v504 = vsel %vm502, %v497, %v501
    %v505 = vsel %vm502, %v491, %v495
    %v506 = vsel %vm502, %v493, %v497
    %v507 = vsel %vm502, %v487, %v491
    %v508 = vsel %vm502, %v489, %v493
    %v509 = vsel %vm502, %v499, %v487
    %v510 = vsel %vm502, %v501, %v489
    %s511 = scalar_lea.vmem %s1, 3
    %v512 = vld [vmem:[%s511] ss:$8 sm:$0xf]
    %v514 = vlaneseq
    %v515 = vshrl.u32 %v514, 7
    %v516 = vsub.s32 0, %v515
    %v517 = vrot.slane %v512, %v516
    %v518 = vlaneseq
    %v519 = vshrl.u32 %v518, 7
    %v520 = vsub.s32 1, %v519
    %v521 = vrot.slane %v512, %v520
    %v522 = vlaneseq
    %v523 = vshrl.u32 %v522, 7
    %v524 = vsub.s32 2, %v523
    %v525 = vrot.slane %v512, %v524
    %v526 = vlaneseq
    %v527 = vshrl.u32 %v526, 7
    %v528 = vsub.s32 3, %v527
    %v529 = vrot.slane %v512, %v528
    %v534 = vmul.f32 %v509, %v517
    %v535 = vmul.f32 %v507, %v521
    %v536 = vmul.f32 %v505, %v525
    %v537 = vmul.f32 %v503, %v529
    %v538 = vmul.f32 %v510, %v517
    %v539 = vmul.f32 %v508, %v521
    %v540 = vmul.f32 %v506, %v525
    %v541 = vmul.f32 %v504, %v529
    %v542 = vpack.c.bf16 %v538, %v534
    %v543 = vpack.c.bf16 %v539, %v535
    %v544 = vpack.c.bf16 %v540, %v536
    %v545 = vpack.c.bf16 %v541, %v537
    %v550 = vunpack.c.l.b16 %v542
    %v551 = vunpack.c.l.b16 %v543
    %v552 = vunpack.c.l.b16 %v544
    %v553 = vunpack.c.l.b16 %v545
    %v554 = vunpack.c.h.b16 %v542
    %v555 = vunpack.c.h.b16 %v543
    %v556 = vunpack.c.h.b16 %v544
    %v557 = vunpack.c.h.b16 %v545
    %v558 = vpack.c.b16 %v551, %v550
    %v559 = vpack.c.b16 %v553, %v552
    %v560 = vpack.c.b16 %v555, %v554
    %v561 = vpack.c.b16 %v557, %v556
    %566 = vst [vmem:[#allocation2 + $0x60] sm:$0xff] %v558
    %567 = vst [vmem:[#allocation2 + $0x68] sm:$0xff] %v559
    %568 = vst [vmem:[#allocation2 + $0x70] sm:$0xff] %v560
    %569 = vst [vmem:[#allocation2 + $0x78] sm:$0xff] %v561
    %v570 = vpack.c.bf16 %v229, %v225
    %v571 = vpack.c.bf16 %v230, %v226
    %v572 = vpack.c.bf16 %v231, %v227
    %v573 = vpack.c.bf16 %v232, %v228
    %v578 = vunpack.c.l.b16 %v570
    %v579 = vunpack.c.l.b16 %v571
    %v580 = vunpack.c.l.b16 %v572
    %v581 = vunpack.c.l.b16 %v573
    %v582 = vunpack.c.h.b16 %v570
    %v583 = vunpack.c.h.b16 %v571
    %v584 = vunpack.c.h.b16 %v572
    %v585 = vunpack.c.h.b16 %v573
    %v586 = vpack.c.b16 %v579, %v578
    %v587 = vpack.c.b16 %v581, %v580
    %v588 = vpack.c.b16 %v583, %v582
    %v589 = vpack.c.b16 %v585, %v584
    %594 = vst [vmem:[#allocation2 + $0x80] sm:$0xff] %v586
    %595 = vst [vmem:[#allocation2 + $0x88] sm:$0xff] %v587
    %596 = vst [vmem:[#allocation2 + $0x90] sm:$0xff] %v588
    %597 = vst [vmem:[#allocation2 + $0x98] sm:$0xff] %v589
    %598 = vrot.lane.b32.xlu0 %v225, 127
    %v599 = vpop.permute.xlu0 %598
    %600 = vrot.lane.b32.xlu0 %v229, 127
    %v601 = vpop.permute.xlu0 %600
    %602 = vrot.lane.b32.xlu0 %v226, 127
    %v603 = vpop.permute.xlu0 %602
    %604 = vrot.lane.b32.xlu0 %v230, 127
    %v605 = vpop.permute.xlu0 %604
    %606 = vrot.lane.b32.xlu0 %v227, 127
    %v607 = vpop.permute.xlu0 %606
    %608 = vrot.lane.b32.xlu0 %v231, 127
    %v609 = vpop.permute.xlu0 %608
    %610 = vrot.lane.b32.xlu0 %v228, 127
    %v611 = vpop.permute.xlu0 %610
    %612 = vrot.lane.b32.xlu0 %v232, 127
    %v613 = vpop.permute.xlu0 %612
    %vm614 = vcmp.lt.s32.totalorder %v250, 127
    %v615 = vsel %vm614, %v607, %v611
    %v616 = vsel %vm614, %v609, %v613
    %v617 = vsel %vm614, %v603, %v607
    %v618 = vsel %vm614, %v605, %v609
    %v619 = vsel %vm614, %v599, %v603
    %v620 = vsel %vm614, %v601, %v605
    %v621 = vsel %vm614, %v611, %v599
    %v622 = vsel %vm614, %v613, %v601
    %s623 = scalar_lea.vmem %s1, 5
    %v624 = vld [vmem:[%s623] ss:$8 sm:$0xf]
    %v626 = vlaneseq
    %v627 = vshrl.u32 %v626, 7
    %v628 = vsub.s32 0, %v627
    %v629 = vrot.slane %v624, %v628
    %v630 = vlaneseq
    %v631 = vshrl.u32 %v630, 7
    %v632 = vsub.s32 1, %v631
    %v633 = vrot.slane %v624, %v632
    %v634 = vlaneseq
    %v635 = vshrl.u32 %v634, 7
    %v636 = vsub.s32 2, %v635
    %v637 = vrot.slane %v624, %v636
    %v638 = vlaneseq
    %v639 = vshrl.u32 %v638, 7
    %v640 = vsub.s32 3, %v639
    %v641 = vrot.slane %v624, %v640
    %v646 = vmul.f32 %v619, %v629
    %v647 = vmul.f32 %v617, %v633
    %v648 = vmul.f32 %v615, %v637
    %v649 = vmul.f32 %v621, %v641
    %v650 = vmul.f32 %v620, %v629
    %v651 = vmul.f32 %v618, %v633
    %v652 = vmul.f32 %v616, %v637
    %v653 = vmul.f32 %v622, %v641
    %v654 = vpack.c.bf16 %v650, %v646
    %v655 = vpack.c.bf16 %v651, %v647
    %v656 = vpack.c.bf16 %v652, %v648
    %v657 = vpack.c.bf16 %v653, %v649
    %v662 = vunpack.c.l.b16 %v654
    %v663 = vunpack.c.l.b16 %v655
    %v664 = vunpack.c.l.b16 %v656
    %v665 = vunpack.c.l.b16 %v657
    %v666 = vunpack.c.h.b16 %v654
    %v667 = vunpack.c.h.b16 %v655
    %v668 = vunpack.c.h.b16 %v656
    %v669 = vunpack.c.h.b16 %v657
    %v670 = vpack.c.b16 %v663, %v662
    %v671 = vpack.c.b16 %v665, %v664
    %v672 = vpack.c.b16 %v667, %v666
    %v673 = vpack.c.b16 %v669, %v668
    %678 = vst [vmem:[#allocation2 + $0xa0] sm:$0xff] %v670
    %679 = vst [vmem:[#allocation2 + $0xa8] sm:$0xff] %v671
    %680 = vst [vmem:[#allocation2 + $0xb0] sm:$0xff] %v672
    %681 = vst [vmem:[#allocation2 + $0xb8] sm:$0xff] %v673
    %682 = vrot.lane.b32.xlu0 %v225, 113
    %v683 = vpop.permute.xlu0 %682
    %684 = vrot.lane.b32.xlu0 %v229, 113
    %v685 = vpop.permute.xlu0 %684
    %686 = vrot.lane.b32.xlu0 %v226, 113
    %v687 = vpop.permute.xlu0 %686
    %688 = vrot.lane.b32.xlu0 %v230, 113
    %v689 = vpop.permute.xlu0 %688
    %690 = vrot.lane.b32.xlu0 %v227, 113
    %v691 = vpop.permute.xlu0 %690
    %692 = vrot.lane.b32.xlu0 %v231, 113
    %v693 = vpop.permute.xlu0 %692
    %694 = vrot.lane.b32.xlu0 %v228, 113
    %v695 = vpop.permute.xlu0 %694
    %696 = vrot.lane.b32.xlu0 %v232, 113
    %v697 = vpop.permute.xlu0 %696
    %vm698 = vcmp.lt.s32.totalorder %v250, 113
    %v699 = vsel %vm698, %v691, %v695
    %v700 = vsel %vm698, %v693, %v697
    %v701 = vsel %vm698, %v687, %v691
    %v702 = vsel %vm698, %v689, %v693
    %v703 = vsel %vm698, %v683, %v687
    %v704 = vsel %vm698, %v685, %v689
    %v705 = vsel %vm698, %v695, %v683
    %v706 = vsel %vm698, %v697, %v685
    %s707 = scalar_lea.vmem %s1, 6
    %v708 = vld [vmem:[%s707] ss:$8 sm:$0xf]
    %v710 = vlaneseq
    %v711 = vshrl.u32 %v710, 7
    %v712 = vsub.s32 0, %v711
    %v713 = vrot.slane %v708, %v712
    %v714 = vlaneseq
    %v715 = vshrl.u32 %v714, 7
    %v716 = vsub.s32 1, %v715
    %v717 = vrot.slane %v708, %v716
    %v718 = vlaneseq
    %v719 = vshrl.u32 %v718, 7
    %v720 = vsub.s32 2, %v719
    %v721 = vrot.slane %v708, %v720
    %v722 = vlaneseq
    %v723 = vshrl.u32 %v722, 7
    %v724 = vsub.s32 3, %v723
    %v725 = vrot.slane %v708, %v724
    %v730 = vmul.f32 %v703, %v713
    %v731 = vmul.f32 %v701, %v717
    %v732 = vmul.f32 %v699, %v721
    %v733 = vmul.f32 %v705, %v725
    %v734 = vmul.f32 %v704, %v713
    %v735 = vmul.f32 %v702, %v717
    %v736 = vmul.f32 %v700, %v721
    %v737 = vmul.f32 %v706, %v725
    %v738 = vpack.c.bf16 %v734, %v730
    %v739 = vpack.c.bf16 %v735, %v731
    %v740 = vpack.c.bf16 %v736, %v732
    %v741 = vpack.c.bf16 %v737, %v733
    %v746 = vunpack.c.l.b16 %v738
    %v747 = vunpack.c.l.b16 %v739
    %v748 = vunpack.c.l.b16 %v740
    %v749 = vunpack.c.l.b16 %v741
    %v750 = vunpack.c.h.b16 %v738
    %v751 = vunpack.c.h.b16 %v739
    %v752 = vunpack.c.h.b16 %v740
    %v753 = vunpack.c.h.b16 %v741
    %v754 = vpack.c.b16 %v747, %v746
    %v755 = vpack.c.b16 %v749, %v748
    %v756 = vpack.c.b16 %v751, %v750
    %v757 = vpack.c.b16 %v753, %v752
    %762 = vst [vmem:[#allocation2 + $0xc0] sm:$0xff] %v754
    %763 = vst [vmem:[#allocation2 + $0xc8] sm:$0xff] %v755
    %764 = vst [vmem:[#allocation2 + $0xd0] sm:$0xff] %v756
    %765 = vst [vmem:[#allocation2 + $0xd8] sm:$0xff] %v757
    %766 = vrot.lane.b32.xlu0 %v225, 112
    %v767 = vpop.permute.xlu0 %766
    %768 = vrot.lane.b32.xlu0 %v229, 112
    %v769 = vpop.permute.xlu0 %768
    %770 = vrot.lane.b32.xlu0 %v226, 112
    %v771 = vpop.permute.xlu0 %770
    %772 = vrot.lane.b32.xlu0 %v230, 112
    %v773 = vpop.permute.xlu0 %772
    %774 = vrot.lane.b32.xlu0 %v227, 112
    %v775 = vpop.permute.xlu0 %774
    %776 = vrot.lane.b32.xlu0 %v231, 112
    %v777 = vpop.permute.xlu0 %776
    %778 = vrot.lane.b32.xlu0 %v228, 112
    %v779 = vpop.permute.xlu0 %778
    %780 = vrot.lane.b32.xlu0 %v232, 112
    %v781 = vpop.permute.xlu0 %780
    %vm782 = vcmp.lt.s32.totalorder %v250, 112
    %v783 = vsel %vm782, %v775, %v779
    %v784 = vsel %vm782, %v777, %v781
    %v785 = vsel %vm782, %v771, %v775
    %v786 = vsel %vm782, %v773, %v777
    %v787 = vsel %vm782, %v767, %v771
    %v788 = vsel %vm782, %v769, %v773
    %v789 = vsel %vm782, %v779, %v767
    %v790 = vsel %vm782, %v781, %v769
    %s791 = scalar_lea.vmem %s1, 7
    %v792 = vld [vmem:[%s791] ss:$8 sm:$0xf]
    %v794 = vlaneseq
    %v795 = vshrl.u32 %v794, 7
    %v796 = vsub.s32 0, %v795
    %v797 = vrot.slane %v792, %v796
    %v798 = vlaneseq
    %v799 = vshrl.u32 %v798, 7
    %v800 = vsub.s32 1, %v799
    %v801 = vrot.slane %v792, %v800
    %v802 = vlaneseq
    %v803 = vshrl.u32 %v802, 7
    %v804 = vsub.s32 2, %v803
    %v805 = vrot.slane %v792, %v804
    %v806 = vlaneseq
    %v807 = vshrl.u32 %v806, 7
    %v808 = vsub.s32 3, %v807
    %v809 = vrot.slane %v792, %v808
    %v814 = vmul.f32 %v787, %v797
    %v815 = vmul.f32 %v785, %v801
    %v816 = vmul.f32 %v783, %v805
    %v817 = vmul.f32 %v789, %v809
    %v818 = vmul.f32 %v788, %v797
    %v819 = vmul.f32 %v786, %v801
    %v820 = vmul.f32 %v784, %v805
    %v821 = vmul.f32 %v790, %v809
    %v822 = vpack.c.bf16 %v818, %v814
    %v823 = vpack.c.bf16 %v819, %v815
    %v824 = vpack.c.bf16 %v820, %v816
    %v825 = vpack.c.bf16 %v821, %v817
    %v830 = vunpack.c.l.b16 %v822
    %v831 = vunpack.c.l.b16 %v823
    %v832 = vunpack.c.l.b16 %v824
    %v833 = vunpack.c.l.b16 %v825
    %v834 = vunpack.c.h.b16 %v822
    %v835 = vunpack.c.h.b16 %v823
    %v836 = vunpack.c.h.b16 %v824
    %v837 = vunpack.c.h.b16 %v825
    %v838 = vpack.c.b16 %v831, %v830
    %v839 = vpack.c.b16 %v833, %v832
    %v840 = vpack.c.b16 %v835, %v834
    %v841 = vpack.c.b16 %v837, %v836
    %846 = vst [vmem:[#allocation2 + $0xe0] sm:$0xff] %v838
    %847 = vst [vmem:[#allocation2 + $0xe8] sm:$0xff] %v839
    %848 = vst [vmem:[#allocation2 + $0xf0] sm:$0xff] %v840
    %849 = vst [vmem:[#allocation2 + $0xf8] sm:$0xff] %v841
    %850 = vrot.lane.b32.xlu0 %v225, 111
    %v851 = vpop.permute.xlu0 %850
    %852 = vrot.lane.b32.xlu0 %v229, 111
    %v853 = vpop.permute.xlu0 %852
    %854 = vrot.lane.b32.xlu0 %v226, 111
    %v855 = vpop.permute.xlu0 %854
    %856 = vrot.lane.b32.xlu0 %v230, 111
    %v857 = vpop.permute.xlu0 %856
    %858 = vrot.lane.b32.xlu0 %v227, 111
    %v859 = vpop.permute.xlu0 %858
    %860 = vrot.lane.b32.xlu0 %v231, 111
    %v861 = vpop.permute.xlu0 %860
    %862 = vrot.lane.b32.xlu0 %v228, 111
    %v863 = vpop.permute.xlu0 %862
    %864 = vrot.lane.b32.xlu0 %v232, 111
    %v865 = vpop.permute.xlu0 %864
    %vm866 = vcmp.lt.s32.totalorder %v250, 111
    %v867 = vsel %vm866, %v859, %v863
    %v868 = vsel %vm866, %v861, %v865
    %v869 = vsel %vm866, %v855, %v859
    %v870 = vsel %vm866, %v857, %v861
    %v871 = vsel %vm866, %v851, %v855
    %v872 = vsel %vm866, %v853, %v857
    %v873 = vsel %vm866, %v863, %v851
    %v874 = vsel %vm866, %v865, %v853
    %s875 = scalar_lea.vmem %s1, 32
    %v876 = vld [vmem:[%s875] ss:$8 sm:$0xf]
    %v878 = vlaneseq
    %v879 = vshrl.u32 %v878, 7
    %v880 = vsub.s32 0, %v879
    %v881 = vrot.slane %v876, %v880
    %v882 = vlaneseq
    %v883 = vshrl.u32 %v882, 7
    %v884 = vsub.s32 1, %v883
    %v885 = vrot.slane %v876, %v884
    %v886 = vlaneseq
    %v887 = vshrl.u32 %v886, 7
    %v888 = vsub.s32 2, %v887
    %v889 = vrot.slane %v876, %v888
    %v890 = vlaneseq
    %v891 = vshrl.u32 %v890, 7
    %v892 = vsub.s32 3, %v891
    %v893 = vrot.slane %v876, %v892
    %v898 = vmul.f32 %v871, %v881
    %v899 = vmul.f32 %v869, %v885
    %v900 = vmul.f32 %v867, %v889
    %v901 = vmul.f32 %v873, %v893
    %v902 = vmul.f32 %v872, %v881
    %v903 = vmul.f32 %v870, %v885
    %v904 = vmul.f32 %v868, %v889
    %v905 = vmul.f32 %v874, %v893
    %v906 = vpack.c.bf16 %v902, %v898
    %v907 = vpack.c.bf16 %v903, %v899
    %v908 = vpack.c.bf16 %v904, %v900
    %v909 = vpack.c.bf16 %v905, %v901
    %v914 = vunpack.c.l.b16 %v906
    %v915 = vunpack.c.l.b16 %v907
    %v916 = vunpack.c.l.b16 %v908
    %v917 = vunpack.c.l.b16 %v909
    %v918 = vunpack.c.h.b16 %v906
    %v919 = vunpack.c.h.b16 %v907
    %v920 = vunpack.c.h.b16 %v908
    %v921 = vunpack.c.h.b16 %v909
    %v922 = vpack.c.b16 %v915, %v914
    %v923 = vpack.c.b16 %v917, %v916
    %v924 = vpack.c.b16 %v919, %v918
    %v925 = vpack.c.b16 %v921, %v920
    %930 = vst [vmem:[#allocation2 + $0x100] sm:$0xff] %v922
    %931 = vst [vmem:[#allocation2 + $0x108] sm:$0xff] %v923
    %932 = vst [vmem:[#allocation2 + $0x110] sm:$0xff] %v924
    %933 = vst [vmem:[#allocation2 + $0x118] sm:$0xff] %v925
    %v934 = vld [vmem:[%s7] sm:$0xff]
    %v935 = vld [vmem:[%s7 + $0x8] sm:$0xff]
    %v936 = vld [vmem:[#allocation2] sm:$0xff]
    %v937 = vld [vmem:[#allocation2 + $0x8] sm:$0xff]
    %v938 = vld [vmem:[#allocation2 + $0x10] sm:$0xff]
    %v939 = vld [vmem:[#allocation2 + $0x18] sm:$0xff]
    %v940 = vld [vmem:[#allocation2 + $0x20] sm:$0xff]
    %v941 = vld [vmem:[#allocation2 + $0x28] sm:$0xff]
    %v942 = vld [vmem:[#allocation2 + $0x30] sm:$0xff]
    %v943 = vld [vmem:[#allocation2 + $0x38] sm:$0xff]
    %v944 = vld [vmem:[#allocation2 + $0x40] sm:$0xff]
    %v945 = vld [vmem:[#allocation2 + $0x48] sm:$0xff]
    %v946 = vld [vmem:[#allocation2 + $0x50] sm:$0xff]
    %v947 = vld [vmem:[#allocation2 + $0x58] sm:$0xff]
    %v948 = vld [vmem:[#allocation2 + $0x60] sm:$0xff]
    %v949 = vld [vmem:[#allocation2 + $0x68] sm:$0xff]
    %v950 = vld [vmem:[#allocation2 + $0x70] sm:$0xff]
    %v951 = vld [vmem:[#allocation2 + $0x78] sm:$0xff]
    %v952 = vld [vmem:[#allocation2 + $0x80] sm:$0xff]
    %v953 = vld [vmem:[#allocation2 + $0x88] sm:$0xff]
    %v954 = vld [vmem:[#allocation2 + $0x90] sm:$0xff]
    %v955 = vld [vmem:[#allocation2 + $0x98] sm:$0xff]
    %v956 = vld [vmem:[#allocation2 + $0xa0] sm:$0xff]
    %v957 = vld [vmem:[#allocation2 + $0xa8] sm:$0xff]
    %v958 = vld [vmem:[#allocation2 + $0xb0] sm:$0xff]
    %v959 = vld [vmem:[#allocation2 + $0xb8] sm:$0xff]
    %v960 = vld [vmem:[#allocation2 + $0xc0] sm:$0xff]
    %v961 = vld [vmem:[#allocation2 + $0xc8] sm:$0xff]
    %v962 = vld [vmem:[#allocation2 + $0xd0] sm:$0xff]
    %v963 = vld [vmem:[#allocation2 + $0xd8] sm:$0xff]
    %v964 = vld [vmem:[#allocation2 + $0xe0] sm:$0xff]
    %v965 = vld [vmem:[#allocation2 + $0xe8] sm:$0xff]
    %v966 = vld [vmem:[#allocation2 + $0xf0] sm:$0xff]
    %v967 = vld [vmem:[#allocation2 + $0xf8] sm:$0xff]
    %v968 = vld [vmem:[#allocation2 + $0x100] sm:$0xff]
    %v969 = vld [vmem:[#allocation2 + $0x108] sm:$0xff]
    %v970 = vld [vmem:[#allocation2 + $0x110] sm:$0xff]
    %v971 = vld [vmem:[#allocation2 + $0x118] sm:$0xff]
    %v974 = vunpack.c.l.b16 %v934
    %v975 = vunpack.c.h.b16 %v934
    %v976 = vunpack.c.l.b16 %v935
    %v977 = vunpack.c.h.b16 %v935
    %v978 = vpack.c.b16 %v976, %v974
    %v979 = vpack.c.b16 %v977, %v975
    %v1017 = vunpack.c.l.b16 %v936
    %v1018 = vunpack.c.h.b16 %v936
    %v1019 = vunpack.c.l.b16 %v937
    %v1020 = vunpack.c.h.b16 %v937
    %v1021 = vunpack.c.l.b16 %v938
    %v1022 = vunpack.c.h.b16 %v938
    %v1023 = vunpack.c.l.b16 %v939
    %v1024 = vunpack.c.h.b16 %v939
    %v1025 = vunpack.c.l.b16 %v940
    %v1026 = vunpack.c.h.b16 %v940
    %v1027 = vunpack.c.l.b16 %v941
    %v1028 = vunpack.c.h.b16 %v941
    %v1029 = vunpack.c.l.b16 %v942
    %v1030 = vunpack.c.h.b16 %v942
    %v1031 = vunpack.c.l.b16 %v943
    %v1032 = vunpack.c.h.b16 %v943
    %v1033 = vunpack.c.l.b16 %v944
    %v1034 = vunpack.c.h.b16 %v944
    %v1035 = vunpack.c.l.b16 %v945
    %v1036 = vunpack.c.h.b16 %v945
    %v1037 = vunpack.c.l.b16 %v946
    %v1038 = vunpack.c.h.b16 %v946
    %v1039 = vunpack.c.l.b16 %v947
    %v1040 = vunpack.c.h.b16 %v947
    %v1041 = vunpack.c.l.b16 %v948
    %v1042 = vunpack.c.h.b16 %v948
    %v1043 = vunpack.c.l.b16 %v949
    %v1044 = vunpack.c.h.b16 %v949
    %v1045 = vunpack.c.l.b16 %v950
    %v1046 = vunpack.c.h.b16 %v950
    %v1047 = vunpack.c.l.b16 %v951
    %v1048 = vunpack.c.h.b16 %v951
    %v1049 = vunpack.c.l.b16 %v952
    %v1050 = vunpack.c.h.b16 %v952
    %v1051 = vunpack.c.l.b16 %v953
    %v1052 = vunpack.c.h.b16 %v953
    %v1053 = vunpack.c.l.b16 %v954
    %v1054 = vunpack.c.h.b16 %v954
    %v1055 = vunpack.c.l.b16 %v955
    %v1056 = vunpack.c.h.b16 %v955
    %v1057 = vunpack.c.l.b16 %v956
    %v1058 = vunpack.c.h.b16 %v956
    %v1059 = vunpack.c.l.b16 %v957
    %v1060 = vunpack.c.h.b16 %v957
    %v1061 = vunpack.c.l.b16 %v958
    %v1062 = vunpack.c.h.b16 %v958
    %v1063 = vunpack.c.l.b16 %v959
    %v1064 = vunpack.c.h.b16 %v959
    %v1065 = vunpack.c.l.b16 %v960
    %v1066 = vunpack.c.h.b16 %v960
    %v1067 = vunpack.c.l.b16 %v961
    %v1068 = vunpack.c.h.b16 %v961
    %v1069 = vunpack.c.l.b16 %v962
    %v1070 = vunpack.c.h.b16 %v962
    %v1071 = vunpack.c.l.b16 %v963
    %v1072 = vunpack.c.h.b16 %v963
    %v1073 = vunpack.c.l.b16 %v964
    %v1074 = vunpack.c.h.b16 %v964
    %v1075 = vunpack.c.l.b16 %v965
    %v1076 = vunpack.c.h.b16 %v965
    %v1077 = vunpack.c.l.b16 %v966
    %v1078 = vunpack.c.h.b16 %v966
    %v1079 = vunpack.c.l.b16 %v967
    %v1080 = vunpack.c.h.b16 %v967
    %v1081 = vunpack.c.l.b16 %v968
    %v1082 = vunpack.c.h.b16 %v968
    %v1083 = vunpack.c.l.b16 %v969
    %v1084 = vunpack.c.h.b16 %v969
    %v1085 = vunpack.c.l.b16 %v970
    %v1086 = vunpack.c.h.b16 %v970
    %v1087 = vunpack.c.l.b16 %v971
    %v1088 = vunpack.c.h.b16 %v971
    %v1089 = vpack.c.b16 %v1021, %v1017
    %v1090 = vpack.c.b16 %v1022, %v1018
    %v1091 = vpack.c.b16 %v1023, %v1019
    %v1092 = vpack.c.b16 %v1024, %v1020
    %v1093 = vpack.c.b16 %v1029, %v1025
    %v1094 = vpack.c.b16 %v1030, %v1026
    %v1095 = vpack.c.b16 %v1031, %v1027
    %v1096 = vpack.c.b16 %v1032, %v1028
    %v1097 = vpack.c.b16 %v1037, %v1033
    %v1098 = vpack.c.b16 %v1038, %v1034
    %v1099 = vpack.c.b16 %v1039, %v1035
    %v1100 = vpack.c.b16 %v1040, %v1036
    %v1101 = vpack.c.b16 %v1045, %v1041
    %v1102 = vpack.c.b16 %v1046, %v1042
    %v1103 = vpack.c.b16 %v1047, %v1043
    %v1104 = vpack.c.b16 %v1048, %v1044
    %v1105 = vpack.c.b16 %v1053, %v1049
    %v1106 = vpack.c.b16 %v1054, %v1050
    %v1107 = vpack.c.b16 %v1055, %v1051
    %v1108 = vpack.c.b16 %v1056, %v1052
    %v1109 = vpack.c.b16 %v1061, %v1057
    %v1110 = vpack.c.b16 %v1062, %v1058
    %v1111 = vpack.c.b16 %v1063, %v1059
    %v1112 = vpack.c.b16 %v1064, %v1060
    %v1113 = vpack.c.b16 %v1069, %v1065
    %v1114 = vpack.c.b16 %v1070, %v1066
    %v1115 = vpack.c.b16 %v1071, %v1067
    %v1116 = vpack.c.b16 %v1072, %v1068
    %v1117 = vpack.c.b16 %v1077, %v1073
    %v1118 = vpack.c.b16 %v1078, %v1074
    %v1119 = vpack.c.b16 %v1079, %v1075
    %v1120 = vpack.c.b16 %v1080, %v1076
    %v1121 = vpack.c.b16 %v1085, %v1081
    %v1122 = vpack.c.b16 %v1086, %v1082
    %v1123 = vpack.c.b16 %v1087, %v1083
    %v1124 = vpack.c.b16 %v1088, %v1084
    %vm1161 = vcmask 130048
    %v1163 = vsel %vm1161, %v979, 0
    %1165 = vmatprep.subr.bf16.mxu0 %v1118
    %1166 = vmatpush1.bf16.msra.mxu0 %v1117
    %1167 = vmatprep.subr.bf16.mxu0 %v1114
    %1168 = vmatpush1.bf16.msra.mxu0 %v1113
    %1169 = vmatprep.subr.bf16.mxu0 %v1110
    %1170 = vmatpush1.bf16.msra.mxu0 %v1109
    %1171 = vmatprep.subr.bf16.mxu0 %v1106
    %1172 = vmatpush1.bf16.msra.mxu0 %v1105
    %1173 = vmatprep.subr.bf16.mxu0 %v1102
    %1174 = vmatpush1.bf16.msra.mxu0 %v1101
    %1175 = vmatprep.subr.bf16.mxu0 %v1098
    %1176 = vmatpush1.bf16.msra.mxu0 %v1097
    %1177 = vmatprep.subr.bf16.mxu0 %v1094
    %1178 = vmatpush1.bf16.msra.mxu0 %v1093
    %1179 = vmatprep.subr.bf16.mxu0 %v1090
    %1180 = vmatpush1.bf16.msra.mxu0 %v1089
    %1181 = vmatprep.subr.bf16.mxu0 0
    %1182 = vmatpush2.bf16.msra.mxu0 0
    %1183 = vmatprep.subr.bf16.mxu0 0
    %1184 = vmatpush2.bf16.msra.mxu0 0
    %1185 = vmatprep.subr.bf16.mxu0 0
    %1186 = vmatpush2.bf16.msra.mxu0 0
    %1187 = vmatprep.subr.bf16.mxu0 0
    %1188 = vmatpush2.bf16.msra.mxu0 0
    %1189 = vmatprep.subr.bf16.mxu0 0
    %1190 = vmatpush2.bf16.msra.mxu0 0
    %1191 = vmatprep.subr.bf16.mxu0 0
    %1192 = vmatpush2.bf16.msra.mxu0 0
    %1193 = vmatprep.subr.bf16.mxu0 0
    %1194 = vmatpush2.bf16.msra.mxu0 0
    %1195 = vmatprep.subr.bf16.mxu0 %v1122
    %1196 = vmatpush2.bf16.msra.mxu0 %v1121
    %1197 = vmatprep.mubr.bf16.mxu0 %v1163
    %1198 = vmatmul.mubr.bf16.gmra.mxu0 %v978
    %v1199 = vpop.f32.mrf.mxu0
    %v1200 = vadd.f32 0.0, %v1199
    %v1201 = vpop.f32.mrf.mxu0
    %v1202 = vadd.f32 0.0, %v1201
    %v1203 = vpop.f32.mrf.mxu0
    %v1204 = vadd.f32 0.0, %v1203
    %v1205 = vpop.f32.mrf.mxu0
    %v1206 = vadd.f32 0.0, %v1205
    %1207 = vdwg.mxu0
    %1208 = vmatprep.subr.bf16.mxu0 %v1120
    %1209 = vmatpush1.bf16.msra.mxu0 %v1119
    %1210 = vmatprep.subr.bf16.mxu0 %v1116
    %1211 = vmatpush1.bf16.msra.mxu0 %v1115
    %1212 = vmatprep.subr.bf16.mxu0 %v1112
    %1213 = vmatpush1.bf16.msra.mxu0 %v1111
    %1214 = vmatprep.subr.bf16.mxu0 %v1108
    %1215 = vmatpush1.bf16.msra.mxu0 %v1107
    %1216 = vmatprep.subr.bf16.mxu0 %v1104
    %1217 = vmatpush1.bf16.msra.mxu0 %v1103
    %1218 = vmatprep.subr.bf16.mxu0 %v1100
    %1219 = vmatpush1.bf16.msra.mxu0 %v1099
    %1220 = vmatprep.subr.bf16.mxu0 %v1096
    %1221 = vmatpush1.bf16.msra.mxu0 %v1095
    %1222 = vmatprep.subr.bf16.mxu0 %v1092
    %1223 = vmatpush1.bf16.msra.mxu0 %v1091
    %1224 = vmatprep.subr.bf16.mxu0 0
    %1225 = vmatpush2.bf16.msra.mxu0 0
    %1226 = vmatprep.subr.bf16.mxu0 0
    %1227 = vmatpush2.bf16.msra.mxu0 0
    %1228 = vmatprep.subr.bf16.mxu0 0
    %1229 = vmatpush2.bf16.msra.mxu0 0
    %1230 = vmatprep.subr.bf16.mxu0 0
    %1231 = vmatpush2.bf16.msra.mxu0 0
    %1232 = vmatprep.subr.bf16.mxu0 0
    %1233 = vmatpush2.bf16.msra.mxu0 0
    %1234 = vmatprep.subr.bf16.mxu0 0
    %1235 = vmatpush2.bf16.msra.mxu0 0
    %1236 = vmatprep.subr.bf16.mxu0 0
    %1237 = vmatpush2.bf16.msra.mxu0 0
    %1238 = vmatprep.subr.bf16.mxu0 %v1124
    %1239 = vmatpush2.bf16.msra.mxu0 %v1123
    %1240 = vmatprep.mubr.bf16.mxu0 %v1163
    %1241 = vmatmul.mubr.bf16.gmra.mxu0 %v978
    %v1242 = vpop.f32.mrf.mxu0
    %v1243 = vadd.f32 0.0, %v1242
    %v1244 = vpop.f32.mrf.mxu0
    %v1245 = vadd.f32 0.0, %v1244
    %v1246 = vpop.f32.mrf.mxu0
    %v1247 = vadd.f32 0.0, %v1246
    %v1248 = vpop.f32.mrf.mxu0
    %v1249 = vadd.f32 0.0, %v1248
    %1250 = vdwg.mxu0
    %v1251 = vld [vmem:[%s8] sm:$0xff]
    %v1252 = vld [vmem:[%s8 + $0x8] sm:$0xff]
    %1254 = vset.pattern.permute.xlu0 0
    %1255 = vperm.xlu0 %1254, %v1251
    %v1256 = vpop.permute.xlu0 %1255
    %1259 = vset.pattern.permute.xlu0 0
    %1260 = vperm.xlu0 %1259, %v1252
    %v1261 = vpop.permute.xlu0 %1260
    %v1263 = vmul.f32 %v1200, %v1256
    %v1264 = vmul.f32 %v1202, %v1256
    %v1265 = vmul.f32 %v1243, %v1256
    %v1266 = vmul.f32 %v1245, %v1256
    %v1267 = vmul.f32 %v1204, %v1261
    %v1268 = vmul.f32 %v1206, %v1261
    %v1269 = vmul.f32 %v1247, %v1261
    %v1270 = vmul.f32 %v1249, %v1261
    %v1271 = vld [vmem:[%s9] sm:$0xff]
    %v1272 = vld [vmem:[%s9 + $0x8] sm:$0xff]
    %1274 = vset.pattern.permute.xlu0 0
    %1275 = vperm.xlu0 %1274, %v1271
    %v1276 = vpop.permute.xlu0 %1275
    %1279 = vset.pattern.permute.xlu0 0
    %1280 = vperm.xlu0 %1279, %v1272
    %v1281 = vpop.permute.xlu0 %1280
    %v1283 = vadd.f32 %v1263, %v1276
    %v1284 = vadd.f32 %v1264, %v1276
    %v1285 = vadd.f32 %v1265, %v1276
    %v1286 = vadd.f32 %v1266, %v1276
    %v1287 = vadd.f32 %v1267, %v1281
    %v1288 = vadd.f32 %v1268, %v1281
    %v1289 = vadd.f32 %v1269, %v1281
    %v1290 = vadd.f32 %v1270, %v1281
    %v1291 = vmax.f32 %v1283, 0.0
    %v1292 = vmax.f32 %v1284, 0.0
    %v1293 = vmax.f32 %v1285, 0.0
    %v1294 = vmax.f32 %v1286, 0.0
    %v1295 = vmax.f32 %v1287, 0.0
    %v1296 = vmax.f32 %v1288, 0.0
    %v1297 = vmax.f32 %v1289, 0.0
    %v1298 = vmax.f32 %v1290, 0.0
    %v1299 = vld [vmem:[%s10] sm:$0xf]
    %v1300 = vpack.c.bf16 %v1295, %v1291
    %v1301 = vpack.c.bf16 %v1296, %v1292
    %v1302 = vpack.c.bf16 %v1297, %v1293
    %v1303 = vpack.c.bf16 %v1298, %v1294
    %v1304 = vld [vmem:[%s11] sm:$0xff]
    %1306 = vset.pattern.permute.xlu0 0
    %1307 = vperm.xlu0 %1306, %v1304
    %v1308 = vpop.permute.xlu0 %1307
    %v1311 = vsel %vm1161, %v1299, 0
    %1313 = vmatprep.subr.bf16.mxu0 0
    %1314 = vmatpush1.bf16.msra.mxu0 0
    %1315 = vmatprep.subr.bf16.mxu0 0
    %1316 = vmatpush1.bf16.msra.mxu0 0
    %1317 = vmatprep.subr.bf16.mxu0 0
    %1318 = vmatpush1.bf16.msra.mxu0 0
    %1319 = vmatprep.subr.bf16.mxu0 0
    %1320 = vmatpush1.bf16.msra.mxu0 0
    %1321 = vmatprep.subr.bf16.mxu0 0
    %1322 = vmatpush1.bf16.msra.mxu0 0
    %1323 = vmatprep.subr.bf16.mxu0 0
    %1324 = vmatpush1.bf16.msra.mxu0 0
    %1325 = vmatprep.subr.bf16.mxu0 0
    %1326 = vmatpush1.bf16.msra.mxu0 0
    %1327 = vmatprep.subr.bf16.mxu0 %v1301
    %1328 = vmatpush1.bf16.msra.mxu0 %v1300
    %1329 = vmatprep.subr.bf16.mxu0 0
    %1330 = vmatpush2.bf16.msra.mxu0 0
    %1331 = vmatprep.subr.bf16.mxu0 0
    %1332 = vmatpush2.bf16.msra.mxu0 0
    %1333 = vmatprep.subr.bf16.mxu0 0
    %1334 = vmatpush2.bf16.msra.mxu0 0
    %1335 = vmatprep.subr.bf16.mxu0 0
    %1336 = vmatpush2.bf16.msra.mxu0 0
    %1337 = vmatprep.subr.bf16.mxu0 0
    %1338 = vmatpush2.bf16.msra.mxu0 0
    %1339 = vmatprep.subr.bf16.mxu0 0
    %1340 = vmatpush2.bf16.msra.mxu0 0
    %1341 = vmatprep.subr.bf16.mxu0 0
    %1342 = vmatpush2.bf16.msra.mxu0 0
    %1343 = vmatprep.subr.bf16.mxu0 0
    %1344 = vmatpush2.bf16.msra.mxu0 0
    %1345 = vmatprep.mubr.bf16.mxu0 0
    %1346 = vmatmul.mubr.bf16.gmra.mxu0 %v1311
    %v1347 = vpop.f32.mrf.mxu0
    %v1348 = vadd.f32 %v1308, %v1347
    %v1349 = vpop.f32.mrf.mxu0
    %v1350 = vadd.f32 %v1308, %v1349
    %v1351 = vpop.f32.mrf.mxu0
    %v1352 = vpop.f32.mrf.mxu0
    %1353 = vdwg.mxu0
    %1354 = vmatprep.subr.bf16.mxu0 0
    %1355 = vmatpush1.bf16.msra.mxu0 0
    %1356 = vmatprep.subr.bf16.mxu0 0
    %1357 = vmatpush1.bf16.msra.mxu0 0
    %1358 = vmatprep.subr.bf16.mxu0 0
    %1359 = vmatpush1.bf16.msra.mxu0 0
    %1360 = vmatprep.subr.bf16.mxu0 0
    %1361 = vmatpush1.bf16.msra.mxu0 0
    %1362 = vmatprep.subr.bf16.mxu0 0
    %1363 = vmatpush1.bf16.msra.mxu0 0
    %1364 = vmatprep.subr.bf16.mxu0 0
    %1365 = vmatpush1.bf16.msra.mxu0 0
    %1366 = vmatprep.subr.bf16.mxu0 0
    %1367 = vmatpush1.bf16.msra.mxu0 0
    %1368 = vmatprep.subr.bf16.mxu0 %v1303
    %1369 = vmatpush1.bf16.msra.mxu0 %v1302
    %1370 = vmatprep.subr.bf16.mxu0 0
    %1371 = vmatpush2.bf16.msra.mxu0 0
    %1372 = vmatprep.subr.bf16.mxu0 0
    %1373 = vmatpush2.bf16.msra.mxu0 0
    %1374 = vmatprep.subr.bf16.mxu0 0
    %1375 = vmatpush2.bf16.msra.mxu0 0
    %1376 = vmatprep.subr.bf16.mxu0 0
    %1377 = vmatpush2.bf16.msra.mxu0 0
    %1378 = vmatprep.subr.bf16.mxu0 0
    %1379 = vmatpush2.bf16.msra.mxu0 0
    %1380 = vmatprep.subr.bf16.mxu0 0
    %1381 = vmatpush2.bf16.msra.mxu0 0
    %1382 = vmatprep.subr.bf16.mxu0 0
    %1383 = vmatpush2.bf16.msra.mxu0 0
    %1384 = vmatprep.subr.bf16.mxu0 0
    %1385 = vmatpush2.bf16.msra.mxu0 0
    %1386 = vmatprep.mubr.bf16.mxu0 0
    %1387 = vmatmul.mubr.bf16.gmra.mxu0 %v1311
    %v1388 = vpop.f32.mrf.mxu0
    %v1389 = vadd.f32 %v1308, %v1388
    %v1390 = vpop.f32.mrf.mxu0
    %v1391 = vadd.f32 %v1308, %v1390
    %v1392 = vpop.f32.mrf.mxu0
    %v1393 = vpop.f32.mrf.mxu0
    %1394 = vdwg.mxu0
    %v1395 = vld [vmem:[%s0] sm:$0xff]
    %v1396 = vld [vmem:[%s0 + $0x8] sm:$0xff]
    %v1397 = vld [vmem:[%s0 + $0x10] sm:$0xff]
    %v1398 = vld [vmem:[%s0 + $0x18] sm:$0xff]
    %v1399 = vadd.f32 %v1348, %v1395
    %v1400 = vadd.f32 %v1350, %v1396
    %v1401 = vadd.f32 %v1389, %v1397
    %v1402 = vadd.f32 %v1391, %v1398
    %1403 = vst [vmem:[#allocation3] sm:$0xff] %v1399
    %1404 = vst [vmem:[#allocation3 + $0x8] sm:$0xff] %v1400
    %1405 = vst [vmem:[#allocation3 + $0x10] sm:$0xff] %v1401
    %1406 = vst [vmem:[#allocation3 + $0x18] sm:$0xff] %v1402
    // Predicated region
    $region50: #{tpu_custom_call.1} parent=1 // pred_check
      _
    $region51: #{tpu_custom_call.1} parent=1 // pred_check_branch
      %1408 = sbr.rel (0) target = $region53
    $region52: #{tpu_custom_call.1} parent=1 // pred_region
      %s1410 = ssub.s32 512, 512
      %1411 = vsyncadd [#allocation4], %s1410
      %s1413 = sshll.u32 [#allocation3], 4
      %s1414 = int_to_ptr.vmem [resolvable:$true] %s1413
      %1416 = dma.vmem_to_hbm [thread:$0]  %s1414, 512, %s12, [#allocation4]
    $region53: #{tpu_custom_call.1} parent=1 // pred_fallthru
      _
    // Predicated region
    $region54: #{tpu_custom_call.1} parent=1 // pred_check
      _
    $region55: #{tpu_custom_call.1} parent=1 // pred_check_branch
      %1418 = sbr.rel (0) target = $region57
    $region56: #{tpu_custom_call.1} parent=1 // pred_region
      %1419 = dma.done [#allocation4], 512
    $region57: #{tpu_custom_call.1} parent=1 // pred_fallthru
      _
    %1420 = vsyncpa [#allocation4], 1

</llo_original>
